<compile_context>
chip_gen: v7x
topology: tpu7x:2x2x1
jax: 0.10.0
libtpu: 0.0.40
codegen_flags: <defaults>
</compile_context>

<pallas_src>
import functools

import jax
import jax.numpy as jnp
from jax.experimental import pallas as pl
from jax.experimental.pallas import tpu as pltpu

_BN_EPS = 1e-5                       # torch.nn.BatchNorm default
_VMEM_LIMIT = 48 * 1024 * 1024       # explicit scoped-VMEM cap (safe on v5e/v6e/v7x)


# ----------------------------- Pallas kernels ------------------------------

def _matmul_stats_kernel(a_ref, w_ref, y_ref, s_ref, q_ref, acc_ref):
    """Tiled bf16 matmul with f32 accumulation + per-channel sum / sumsq for BN.

    grid = (cout_tiles [parallel], m_tiles [arbitrary], k_tiles [arbitrary])
    a: (tm, tk) bf16, w: (tk, tn) bf16 -> y: (tm, tn) bf16, s/q: (1, tn) f32.
    """
    i = pl.program_id(1)             # M tile
    k = pl.program_id(2)             # K tile
    nk = pl.num_programs(2)

    @pl.when(k == 0)
    def _():
        acc_ref[...] = jnp.zeros_like(acc_ref)

    acc_ref[...] += jnp.dot(a_ref[...], w_ref[...],
                            preferred_element_type=jnp.float32)

    @pl.when(jnp.logical_and(i == 0, k == 0))
    def _():
        s_ref[...] = jnp.zeros_like(s_ref)
        q_ref[...] = jnp.zeros_like(q_ref)

    @pl.when(k == nk - 1)
    def _():
        y = acc_ref[...]
        y_ref[...] = y.astype(y_ref.dtype)
        s_ref[...] += jnp.sum(y, axis=0, keepdims=True)
        q_ref[...] += jnp.sum(y * y, axis=0, keepdims=True)


def _bn_finalize_kernel(*refs, inv_m, relu, has_res):
    """Training-mode BN normalize (+ optional residual add) (+ optional ReLU)."""
    if has_res:
        y_ref, s_ref, q_ref, g_ref, b_ref, r_ref, o_ref = refs
    else:
        y_ref, s_ref, q_ref, g_ref, b_ref, o_ref = refs
        r_ref = None
    mean = s_ref[...] * inv_m
    var = jnp.maximum(q_ref[...] * inv_m - mean * mean, 0.0)   # biased batch var
    scale = jax.lax.rsqrt(var + _BN_EPS) * g_ref[...]
    y = (y_ref[...].astype(jnp.float32) - mean) * scale + b_ref[...]
    if has_res:
        y = y + r_ref[...].astype(jnp.float32)
    if relu:
        y = jnp.maximum(y, 0.0)
    o_ref[...] = y.astype(o_ref.dtype)


def _max_over_taps_kernel(x_ref, o_ref):
    # x: (9, tm, C) pooling taps -> o: (tm, C)
    o_ref[...] = jnp.max(x_ref[...], axis=0)


def _global_avgpool_kernel(x_ref, o_ref):
    # x: (N, H*W, C) -> o: (N, C)   (AdaptiveAvgPool2d((1,1)) + flatten)
    o_ref[...] = jnp.mean(x_ref[...].astype(jnp.float32), axis=1)


def _classifier_kernel(x_ref, w1_ref, b1_ref, g_ref, b_ref, mask_ref,
                       w2_ref, b2_ref, o_ref, *, scale):
    """ClassBlock fused: Linear(2048,512) -> BN1d(batch stats) -> Dropout -> Linear."""
    h = jnp.dot(x_ref[...].astype(jnp.bfloat16), w1_ref[...],
                preferred_element_type=jnp.float32) + b1_ref[...]
    mean = jnp.mean(h, axis=0, keepdims=True)
    var = jnp.mean((h - mean) ** 2, axis=0, keepdims=True)
    h = (h - mean) * jax.lax.rsqrt(var + _BN_EPS) * g_ref[...] + b_ref[...]
    h = h * mask_ref[...] * scale                         # inverted dropout
    o_ref[...] = jnp.dot(h.astype(jnp.bfloat16), w2_ref[...],
                         preferred_element_type=jnp.float32) + b2_ref[...]


# ------------------------------- wrappers -----------------------------------

def _vmem_spec():
    return pl.BlockSpec(memory_space=pltpu.MemorySpace.VMEM)


def _pick_tile(dim, candidates):
    for c in candidates:
        if dim >= c and dim % c == 0:
            return c
    return dim


def _im2col(x, kh, kw, stride, pad):
    n, h, w, c = x.shape
    ho = (h + 2 * pad - kh) // stride + 1
    wo = (w + 2 * pad - kw) // stride + 1
    xp = jnp.pad(x, ((0, 0), (pad, pad), (pad, pad), (0, 0)))
    cols = []
    for i in range(kh):
        for j in range(kw):
            cols.append(xp[:, i:i + stride * ho:stride, j:j + stride * wo:stride, :])
    patches = jnp.concatenate(cols, axis=-1).reshape(n * ho * wo, kh * kw * c)
    return patches, n, ho, wo


def conv_bn(x, w, gamma, beta, *, stride, pad, relu, residual=None):
    """conv (no bias) + BatchNorm2d (training stats) + optional residual + ReLU.

    x: NHWC bf16; w: (kh,kw,cin,cout) f32 params (cast to bf16 for the MXU);
    returns NHWC bf16.
    """
    kh, kw, cin, cout = w.shape
    patches, n, ho, wo = _im2col(x.astype(jnp.bfloat16), kh, kw, stride, pad)
    m, k = patches.shape
    w2d = w.reshape(kh * kw * cin, cout).astype(jnp.bfloat16)

    tm = _pick_tile(m, (512, 256, 128, 64, 32, 16, 8))
    tn = _pick_tile(cout, (256, 128))        # 256 feeds the v6e/v7x 256-wide MXU
    tk = _pick_tile(k, (512, 256, 128))
    gm, gn, gk = m // tm, cout // tn, k // tk

    y, ssum, ssq = pl.pallas_call(
        _matmul_stats_kernel,
        out_shape=(
            jax.ShapeDtypeStruct((m, cout), jnp.bfloat16),
            jax.ShapeDtypeStruct((1, cout), jnp.float32),
            jax.ShapeDtypeStruct((1, cout), jnp.float32),
        ),
        grid=(gn, gm, gk),
        in_specs=[
            pl.BlockSpec((tm, tk), lambda j, i, kk: (i, kk)),
            pl.BlockSpec((tk, tn), lambda j, i, kk: (kk, j)),
        ],
        out_specs=(
            pl.BlockSpec((tm, tn), lambda j, i, kk: (i, j)),
            pl.BlockSpec((1, tn), lambda j, i, kk: (0, j)),
            pl.BlockSpec((1, tn), lambda j, i, kk: (0, j)),
        ),
        scratch_shapes=[pltpu.VMEM((tm, tn), jnp.float32)],
        compiler_params=pltpu.CompilerParams(
            dimension_semantics=("parallel", "arbitrary", "arbitrary"),
            vmem_limit_bytes=_VMEM_LIMIT),
    )(patches, w2d)

    # ---- pass 2: normalize (+ residual) (+ relu), row/channel tiled ----
    tm2 = _pick_tile(m, (1024, 512, 256, 128, 64, 32, 16, 8))
    tn2 = _pick_tile(cout, (256, 128))
    has_res = residual is not None

    in_specs = [
        pl.BlockSpec((tm2, tn2), lambda i, j: (i, j)),     # y
        pl.BlockSpec((1, tn2), lambda i, j: (0, j)),       # sum
        pl.BlockSpec((1, tn2), lambda i, j: (0, j)),       # sumsq
        pl.BlockSpec((1, tn2), lambda i, j: (0, j)),       # gamma
        pl.BlockSpec((1, tn2), lambda i, j: (0, j)),       # beta
    ]
    args = [y, ssum, ssq, gamma, beta]
    if has_res:
        in_specs.append(pl.BlockSpec((tm2, tn2), lambda i, j: (i, j)))
        args.append(residual.reshape(m, cout).astype(jnp.bfloat16))

    out = pl.pallas_call(
        functools.partial(_bn_finalize_kernel, inv_m=1.0 / m,
                          relu=relu, has_res=has_res),
        out_shape=jax.ShapeDtypeStruct((m, cout), jnp.bfloat16),
        grid=(m // tm2, cout // tn2),
        in_specs=in_specs,
        out_specs=pl.BlockSpec((tm2, tn2), lambda i, j: (i, j)),
        compiler_params=pltpu.CompilerParams(
            dimension_semantics=("parallel", "parallel"),
            vmem_limit_bytes=_VMEM_LIMIT),
    )(*args)
    return out.reshape(n, ho, wo, cout)


def maxpool_3x3_s2_p1(x):
    n, h, w, c = x.shape
    ho = (h + 2 - 3) // 2 + 1
    wo = (w + 2 - 3) // 2 + 1
    xp = jnp.pad(x, ((0, 0), (1, 1), (1, 1), (0, 0)), constant_values=-jnp.inf)
    taps = []
    for i in range(3):
        for j in range(3):
            taps.append(xp[:, i:i + 2 * ho:2, j:j + 2 * wo:2, :].reshape(n * ho * wo, c))
    stacked = jnp.stack(taps, axis=0)              # (9, N*Ho*Wo, C)
    m = n * ho * wo
    tm = _pick_tile(m, (1024, 512, 256, 128, 64, 32, 16, 8))
    out = pl.pallas_call(
        _max_over_taps_kernel,
        out_shape=jax.ShapeDtypeStruct((m, c), x.dtype),
        grid=(m // tm,),
        in_specs=[pl.BlockSpec((9, tm, c), lambda i: (0, i, 0))],
        out_specs=pl.BlockSpec((tm, c), lambda i: (i, 0)),
        compiler_params=pltpu.CompilerParams(
            dimension_semantics=("parallel",),
            vmem_limit_bytes=_VMEM_LIMIT),
    )(stacked)
    return out.reshape(n, ho, wo, c)


def global_avgpool(x):
    n, h, w, c = x.shape
    return pl.pallas_call(
        _global_avgpool_kernel,
        out_shape=jax.ShapeDtypeStruct((n, c), jnp.float32),
        in_specs=[_vmem_spec()],
        out_specs=_vmem_spec(),
    )(x.reshape(n, h * w, c))


def class_block(cls, feat, dropout_key, droprate=0.5):
    """ClassBlock: Linear(2048,512) -> BatchNorm1d -> Dropout(0.5) -> Linear, fused."""
    n = feat.shape[0]
    hid = cls["w1"].shape[1]
    num_classes = cls["w2"].shape[1]
    # training-mode inverted dropout; mask generated host-side (no in-kernel PRNG).
    keep = jax.random.bernoulli(dropout_key, p=1.0 - droprate,
                                shape=(n, hid)).astype(jnp.float32)
    logits = pl.pallas_call(
        functools.partial(_classifier_kernel, scale=1.0 / (1.0 - droprate)),
        out_shape=jax.ShapeDtypeStruct((n, num_classes), jnp.float32),
        in_specs=[_vmem_spec()] * 8,
        out_specs=_vmem_spec(),
    )(feat,
      cls["w1"].astype(jnp.bfloat16), cls["b1"], cls["bn_g"], cls["bn_b"],
      keep,
      cls["w2"].astype(jnp.bfloat16), cls["b2"])
    return logits


def bottleneck(x, p):
    s = p["stride"]
    out = conv_bn(x, p["w1"], p["g1"], p["b1"], stride=1, pad=0, relu=True)
    out = conv_bn(out, p["w2"], p["g2"], p["b2"], stride=s, pad=1, relu=True)
    if "wd" in p:
        identity = conv_bn(x, p["wd"], p["gd"], p["bd"], stride=s, pad=0, relu=False)
    else:
        identity = x
    # residual add + ReLU fused into the 3rd conv's BN-finalize kernel
    return conv_bn(out, p["w3"], p["g3"], p["b3"], stride=1, pad=0,
                   relu=True, residual=identity)


def ft_net_forward(params, x_nchw, *, training=True, dropout_seed=0):
    x = jnp.transpose(x_nchw, (0, 2, 3, 1)).astype(jnp.bfloat16)   # NCHW -> NHWC
    x = conv_bn(x, params["conv1_w"], params["bn1_g"], params["bn1_b"],
                stride=2, pad=3, relu=True)
    x = maxpool_3x3_s2_p1(x)
    for layer in params["layers"]:
        for blk in layer:
            x = bottleneck(x, blk)
    feat = global_avgpool(x)          # == x.view(x.size(0), x.size(1)) -> (N, 2048) f32
    if not training:
        return feat
    return class_block(params["cls"], feat, jax.random.PRNGKey(dropout_seed))


# ---------------------- deterministic parameter init ------------------------

def init_params(num_classes, seed=0):
    key = jax.random.PRNGKey(seed)
    counter = [0]

    def nxt():
        counter[0] += 1
        return jax.random.fold_in(key, counter[0])

    def conv_w(kh, kw, cin, cout):
        std = (2.0 / (cout * kh * kw)) ** 0.5      # kaiming-normal fan_out (resnet default)
        return std * jax.random.normal(nxt(), (kh, kw, cin, cout), jnp.float32)

    def bn(c):
        return jnp.ones((1, c), jnp.float32), jnp.zeros((1, c), jnp.float32)

    params = {"conv1_w": conv_w(7, 7, 3, 64)}
    params["bn1_g"], params["bn1_b"] = bn(64)

    layers = []
    inplanes = 64
    for planes, nblocks, stride in [(64, 3, 1), (128, 4, 2), (256, 6, 2), (512, 3, 2)]:
        layer = []
        for b in range(nblocks):
            s = stride if b == 0 else 1
            blk = {"stride": s}
            blk["w1"] = conv_w(1, 1, inplanes, planes)
            blk["g1"], blk["b1"] = bn(planes)
            blk["w2"] = conv_w(3, 3, planes, planes)
            blk["g2"], blk["b2"] = bn(planes)
            blk["w3"] = conv_w(1, 1, planes, planes * 4)
            blk["g3"], blk["b3"] = bn(planes * 4)
            if b == 0 and (s != 1 or inplanes != planes * 4):
                blk["wd"] = conv_w(1, 1, inplanes, planes * 4)
                blk["gd"], blk["bd"] = bn(planes * 4)
            layer.append(blk)
            inplanes = planes * 4
        layers.append(layer)
    params["layers"] = layers

    # ClassBlock(2048, num_classes, droprate=0.5): Linear->BN1d->Dropout->Linear
    hid = 512
    cls = {
        "w1": ((2.0 / hid) ** 0.5) * jax.random.normal(nxt(), (2048, hid), jnp.float32),
        "b1": jnp.zeros((1, hid), jnp.float32),
        "bn_g": 1.0 + 0.02 * jax.random.normal(nxt(), (1, hid), jnp.float32),
        "bn_b": jnp.zeros((1, hid), jnp.float32),
        "w2": 0.001 * jax.random.normal(nxt(), (hid, num_classes), jnp.float32),
        "b2": jnp.zeros((1, num_classes), jnp.float32),
    }
    params["cls"] = cls
    return params


if __name__ == "__main__":
    num_classes = 16
    params = init_params(num_classes, seed=0)
    x = jax.random.normal(jax.random.PRNGKey(0), (2, 3, 64, 64), jnp.float32)

    logits = ft_net_forward(params, x, training=True, dropout_seed=0)
    logits = jax.block_until_ready(logits)
    assert logits.shape == (2, num_classes), logits.shape
    assert bool(jnp.all(jnp.isfinite(logits)))

    # inference path (returns the 2048-d feature, as in the torch module when not training)
    feat = jax.block_until_ready(ft_net_forward(params, x, training=False))
    assert feat.shape == (2, 2048), feat.shape

    print("KERNEL_OK")
</pallas_src>

<mosaic_0001>
module attributes {stable_mosaic.version = 11 : i64} {
  func.func @_matmul_stats_kernel(%arg0: i32, %arg1: i32, %arg2: i32, %arg3: memref<512x147xbf16, #tpu.memory_space<vmem>>, %arg4: memref<147x64xbf16, #tpu.memory_space<vmem>>, %arg5: memref<512x64xbf16, #tpu.memory_space<vmem>>, %arg6: memref<1x64xf32, #tpu.memory_space<vmem>>, %arg7: memref<1x64xf32, #tpu.memory_space<vmem>>, %arg8: memref<512x64xf32, #tpu.memory_space<vmem>>) attributes {dimension_semantics = [#tpu.dimension_semantics<parallel>, #tpu.dimension_semantics<arbitrary>, #tpu.dimension_semantics<arbitrary>], iteration_bounds = array<i64: 1, 4, 1>, scalar_prefetch = 0 : i64, scratch_operands = 1 : i64, tpu.core_type = #tpu.core_type<tc>, window_params = [{transform_indices = @transform_0, window_bounds = array<i64: 512, 147>}, {transform_indices = @transform_1, window_bounds = array<i64: 147, 64>}, {transform_indices = @transform_2, window_bounds = array<i64: 512, 64>}, {transform_indices = @transform_3, window_bounds = array<i64: 1, 64>}, {transform_indices = @transform_4, window_bounds = array<i64: 1, 64>}]} {
    %c0_i32 = arith.constant 0 : i32
    %0 = arith.cmpi eq, %arg2, %c0_i32 : i32
    %1 = arith.extui %0 : i1 to i32
    %c0_i32_0 = arith.constant 0 : i32
    %2 = arith.cmpi ne, %1, %c0_i32_0 : i32
    scf.if %2 {
      %cst_13 = arith.constant 0.000000e+00 : f32
      %17 = vector.broadcast %cst_13 : f32 to vector<512x64xf32>
      %c0_14 = arith.constant 0 : index
      %c0_15 = arith.constant 0 : index
      %18 = vector.load %arg8[%c0_14, %c0_15] : memref<512x64xf32, #tpu.memory_space<vmem>>, vector<512x64xf32>
      tpu.vector_store %arg8[%c0_14, %c0_15], %17 {strides = array<i32>} : memref<512x64xf32, #tpu.memory_space<vmem>>, vector<512x64xf32>,
    } else {
    }
    %c0 = arith.constant 0 : index
    %c0_1 = arith.constant 0 : index
    %3 = vector.load %arg8[%c0, %c0_1] : memref<512x64xf32, #tpu.memory_space<vmem>>, vector<512x64xf32>
    %c0_2 = arith.constant 0 : index
    %c0_3 = arith.constant 0 : index
    %4 = vector.load %arg3[%c0_2, %c0_3] : memref<512x147xbf16, #tpu.memory_space<vmem>>, vector<512x147xbf16>
    %c0_4 = arith.constant 0 : index
    %c0_5 = arith.constant 0 : index
    %5 = vector.load %arg4[%c0_4, %c0_5] : memref<147x64xbf16, #tpu.memory_space<vmem>>, vector<147x64xbf16>
    %cst = arith.constant dense<0.000000e+00> : vector<512x64xf32>
    %6 = tpu.matmul %4, %5, %cst {dimension_numbers = #tpu.dot_dimension_numbers<[1], [0], [0], [1], [0, 0, 1, 1], [], []>} : vector<512x147xbf16>, vector<147x64xbf16>, vector<512x64xf32> -> vector<512x64xf32>
    %7 = arith.addf %3, %6 : vector<512x64xf32>
    %c0_6 = arith.constant 0 : index
    %c0_7 = arith.constant 0 : index
    %8 = vector.load %arg8[%c0_6, %c0_7] : memref<512x64xf32, #tpu.memory_space<vmem>>, vector<512x64xf32>
    tpu.vector_store %arg8[%c0_6, %c0_7], %7 {strides = array<i32>} : memref<512x64xf32, #tpu.memory_space<vmem>>, vector<512x64xf32>,
    %c0_i32_8 = arith.constant 0 : i32
    %9 = arith.cmpi eq, %arg1, %c0_i32_8 : i32
    %c0_i32_9 = arith.constant 0 : i32
    %10 = arith.cmpi eq, %arg2, %c0_i32_9 : i32
    %11 = arith.andi %9, %10 : i1
    %12 = arith.extui %11 : i1 to i32
    %c0_i32_10 = arith.constant 0 : i32
    %13 = arith.cmpi ne, %12, %c0_i32_10 : i32
    scf.if %13 {
      %cst_13 = arith.constant 0.000000e+00 : f32
      %17 = vector.broadcast %cst_13 : f32 to vector<1x64xf32>
      %c0_14 = arith.constant 0 : index
      %c0_15 = arith.constant 0 : index
      %18 = vector.load %arg6[%c0_14, %c0_15] : memref<1x64xf32, #tpu.memory_space<vmem>>, vector<1x64xf32>
      tpu.vector_store %arg6[%c0_14, %c0_15], %17 {strides = array<i32>} : memref<1x64xf32, #tpu.memory_space<vmem>>, vector<1x64xf32>,
      %cst_16 = arith.constant 0.000000e+00 : f32
      %19 = vector.broadcast %cst_16 : f32 to vector<1x64xf32>
      %c0_17 = arith.constant 0 : index
      %c0_18 = arith.constant 0 : index
      %20 = vector.load %arg7[%c0_17, %c0_18] : memref<1x64xf32, #tpu.memory_space<vmem>>, vector<1x64xf32>
      tpu.vector_store %arg7[%c0_17, %c0_18], %19 {strides = array<i32>} : memref<1x64xf32, #tpu.memory_space<vmem>>, vector<1x64xf32>,
    } else {
    }
    %c0_i32_11 = arith.constant 0 : i32
    %14 = arith.cmpi eq, %arg2, %c0_i32_11 : i32
    %15 = arith.extui %14 : i1 to i32
    %c0_i32_12 = arith.constant 0 : i32
    %16 = arith.cmpi ne, %15, %c0_i32_12 : i32
    scf.if %16 {
      %c0_13 = arith.constant 0 : index
      %c0_14 = arith.constant 0 : index
      %17 = vector.load %arg8[%c0_13, %c0_14] : memref<512x64xf32, #tpu.memory_space<vmem>>, vector<512x64xf32>
      %18 = arith.truncf %17 : vector<512x64xf32> to vector<512x64xbf16>
      %c0_15 = arith.constant 0 : index
      %c0_16 = arith.constant 0 : index
      %19 = vector.load %arg5[%c0_15, %c0_16] : memref<512x64xbf16, #tpu.memory_space<vmem>>, vector<512x64xbf16>
      tpu.vector_store %arg5[%c0_15, %c0_16], %18 {strides = array<i32>} : memref<512x64xbf16, #tpu.memory_space<vmem>>, vector<512x64xbf16>,
      %c0_17 = arith.constant 0 : index
      %c0_18 = arith.constant 0 : index
      %20 = vector.load %arg6[%c0_17, %c0_18] : memref<1x64xf32, #tpu.memory_space<vmem>>, vector<1x64xf32>
      %cst_19 = arith.constant dense<0.000000e+00> : vector<64xf32>
      %21 = vector.multi_reduction <add>, %17, %cst_19 [0] : vector<512x64xf32> to vector<64xf32>
      %22 = vector.shape_cast %21 : vector<64xf32> to vector<1x64xf32>
      %23 = arith.addf %20, %22 : vector<1x64xf32>
      %c0_20 = arith.constant 0 : index
      %c0_21 = arith.constant 0 : index
      %24 = vector.load %arg6[%c0_20, %c0_21] : memref<1x64xf32, #tpu.memory_space<vmem>>, vector<1x64xf32>
      tpu.vector_store %arg6[%c0_20, %c0_21], %23 {strides = array<i32>} : memref<1x64xf32, #tpu.memory_space<vmem>>, vector<1x64xf32>,
      %c0_22 = arith.constant 0 : index
      %c0_23 = arith.constant 0 : index
      %25 = vector.load %arg7[%c0_22, %c0_23] : memref<1x64xf32, #tpu.memory_space<vmem>>, vector<1x64xf32>
      %26 = arith.mulf %17, %17 : vector<512x64xf32>
      %cst_24 = arith.constant dense<0.000000e+00> : vector<64xf32>
      %27 = vector.multi_reduction <add>, %26, %cst_24 [0] : vector<512x64xf32> to vector<64xf32>
      %28 = vector.shape_cast %27 : vector<64xf32> to vector<1x64xf32>
      %29 = arith.addf %25, %28 : vector<1x64xf32>
      %c0_25 = arith.constant 0 : index
      %c0_26 = arith.constant 0 : index
      %30 = vector.load %arg7[%c0_25, %c0_26] : memref<1x64xf32, #tpu.memory_space<vmem>>, vector<1x64xf32>
      tpu.vector_store %arg7[%c0_25, %c0_26], %29 {strides = array<i32>} : memref<1x64xf32, #tpu.memory_space<vmem>>, vector<1x64xf32>,
    } else {
    }
    return
  }
  func.func @transform_0(%arg0: i32, %arg1: i32, %arg2: i32) -> (i32, i32) {
    %c0_i32 = arith.constant 0 : i32
    return %arg1, %arg2 : i32, i32
  }
  func.func @transform_1(%arg0: i32, %arg1: i32, %arg2: i32) -> (i32, i32) {
    %c0_i32 = arith.constant 0 : i32
    return %arg2, %arg0 : i32, i32
  }
  func.func @transform_2(%arg0: i32, %arg1: i32, %arg2: i32) -> (i32, i32) {
    %c0_i32 = arith.constant 0 : i32
    return %arg1, %arg0 : i32, i32
  }
  func.func @transform_3(%arg0: i32, %arg1: i32, %arg2: i32) -> (i32, i32) {
    %c0_i32 = arith.constant 0 : i32
    %c0_i32_0 = arith.constant 0 : i32
    return %c0_i32, %arg0 : i32, i32
  }
  func.func @transform_4(%arg0: i32, %arg1: i32, %arg2: i32) -> (i32, i32) {
    %c0_i32 = arith.constant 0 : i32
    %c0_i32_0 = arith.constant 0 : i32
    return %c0_i32, %arg0 : i32, i32
  }
}

</mosaic_0001>

<llo_original>
// kernel: tpu_custom_call.1
$region0: #{tpu_custom_call.1}
  #allocation0 [shape = 'u32[]', space=smem, size = 0x4, offset = 0x4, fixed_abs, tag = 'smem constant byte address 0x4 - core index']
  #allocation1 [shape = 'u32[144,128]{1,0:T(1,128)}', space=vmem, size = 0x12000, scoped, tag = 'internal scratch']
  #allocation2 [shape = 'f32[512,64]{1,0:T(8,128)}', space=vmem, size = 0x40000, scoped, tag = 'scratch operand']
  %s0 = inlined_call_operand.vmem [shape: bf16[2048,147], index: 0, kind: input, shape index: {}]
  %s1 = inlined_call_operand.vmem [shape: bf16[147,64], index: 1, kind: input, shape index: {}]
  %s2 = inlined_call_operand.vmem [shape: bf16[2048,64], index: 2, kind: output, shape index: {0}]
  %s3 = inlined_call_operand.hbm [shape: f32[1,64], index: 3, kind: output, shape index: {1}]
  %s4 = inlined_call_operand.hbm [shape: f32[1,64], index: 4, kind: output, shape index: {2}]
  %5 = xla_tuple %s2, %s3, %s4
  %s6 = sld [smem:[#allocation0]]
  $region69: #{tpu_custom_call.1} parent=0
    _
  %s8 = ssub.s32 1, %s6
  %s9 = scalar_select 0, %s8, %s6
  $region1: #{tpu_custom_call.1} parent=0
    #allocation3 [shape = 'u8[512]{0}', space=vmem, size = 0x400, scoped, tag = 'output window, operand 1, single buffered']
    #allocation4 [shape = 's32[2]{0}', space=sflag, size = 0x8, scoped, tag = 'scoped memory for tpu_custom_call.1']
    #allocation5 [shape = 'u8[512]{0}', space=vmem, size = 0x400, scoped, tag = 'output window, operand 2, single buffered']
    #allocation6 [shape = 's32[1]{0}', space=sflag, size = 0x4, scoped, tag = 'scoped memory for tpu_custom_call.1']
    %10 = vsyncpa [#allocation4], 0
    %11 = vsyncpa [#allocation6], 0
    loop: start=0, step=1, limit=6
    $region2: #{tpu_custom_call.1} parent=1 // loop_pre_header
      _
    $region3: #{tpu_custom_call.1} parent=1 // loop_header
      %s13 = sphi 0, %s17
      %p14 = scmp.ge.s32.totalorder %s13, 6
      %s20 = sphi 0, %s39
      %s21 = sphi 0, %s35
      %s22 = sphi 0, %s31
      %s23 = sphi 0, %s20
      %s24 = sphi 0, %s21
      %s25 = sphi 0, %s22
      %s26 = sphi 0, %s23
      %s27 = sphi 0, %s24
      %s28 = sphi 0, %s25
      %s44 = sphi 0, %s46
      %s47 = sphi 0, %s44
      %s48 = sphi 0, %s47
      %s64 = sphi 0, %s48
      %s72 = sphi 0, %s74
      %s75 = sphi 0, %s72
      %s76 = sphi 0, %s75
      %s92 = sphi 0, %s76
      %s100 = sphi 0, %s102
      %s103 = sphi 0, %s100
      %s104 = sphi 0, %s103
      %s120 = sphi 0, %s104
      %s126 = sphi 0, %s128
      %s129 = sphi 0, %s126
      %s130 = sphi 0, %s129
      %s146 = sphi 0, %s130
      %s152 = sphi 0, %s154
      %s155 = sphi 0, %s152
      %s156 = sphi 0, %s155
      %s172 = sphi 0, %s156
    $region4: #{tpu_custom_call.1} parent=1 // loop_header_branch
      %16 = sbr.rel (%p14) target = $region8
    $region5: #{tpu_custom_call.1} parent=1 // loop_body
      %s18 = ssub.s32 %s13, 1
      %s19 = ssub.s32 %s13, 2
      %s29 = sadd.s32 1, %s22
      %p30 = scmp.ge.s32.totalorder %s29, 1
      %s31 = scalar_select %p30, 0, %s29
      %s32 = sadd.s32 1, %s21
      %s33 = scalar_select %p30, %s32, %s21
      %p34 = scmp.ge.s32.totalorder %s33, 4
      %s35 = scalar_select %p34, 0, %s33
      %s36 = sadd.s32 1, %s20
      %s37 = scalar_select %p34, %s36, %s20
      %p38 = scmp.ge.s32.totalorder %s37, 1
      %s39 = scalar_select %p38, 0, %s37
      %s40 = ssub.s32 %s21, %s35
      %s41 = ssub.s32 %s22, %s31
      %s42 = sor.u32 %s40, %s41
      %p43 = scmp.eq.s32.totalorder %s42, 0
      %s45 = sadd.s32 %s44, 1
      %s46 = scalar_select %p43, %s44, %s45
      %p49 = pneg %p43
      %p50 = scmp.eq.s32.totalorder %s13, 3
      %p51 = por %p49, %p50
      %p52 = scmp.ne.s32.totalorder %s44, %s47
      %p53 = scmp.eq.s32.totalorder %s13, 0
      %p54 = por %p52, %p53
      %p55 = scmp.ne.s32.totalorder %s44, %s47
      %p56 = scmp.eq.s32.totalorder %s18, 3
      %p57 = por %p55, %p56
      %p58 = scmp.ne.s32.totalorder %s47, %s48
      %p59 = scmp.eq.s32.totalorder %s18, 0
      %p60 = por %p58, %p59
      %p61 = scmp.ne.s32.totalorder %s47, %s48
      %p62 = scmp.eq.s32.totalorder %s19, 3
      %p63 = por %p61, %p62
      %p65 = scmp.ne.s32.totalorder %s48, %s64
      %p66 = scmp.eq.s32.totalorder %s19, 0
      %p67 = por %p65, %p66
      %s68 = ssub.s32 %s22, %s31
      %s69 = ssub.s32 %s20, %s39
      %s70 = sor.u32 %s68, %s69
      %p71 = scmp.eq.s32.totalorder %s70, 0
      %s73 = sadd.s32 %s72, 1
      %s74 = scalar_select %p71, %s72, %s73
      %p77 = pneg %p71
      %p78 = scmp.eq.s32.totalorder %s13, 3
      %p79 = por %p77, %p78
      %p80 = scmp.ne.s32.totalorder %s72, %s75
      %p81 = scmp.eq.s32.totalorder %s13, 0
      %p82 = por %p80, %p81
      %p83 = scmp.ne.s32.totalorder %s72, %s75
      %p84 = scmp.eq.s32.totalorder %s18, 3
      %p85 = por %p83, %p84
      %p86 = scmp.ne.s32.totalorder %s75, %s76
      %p87 = scmp.eq.s32.totalorder %s18, 0
      %p88 = por %p86, %p87
      %p89 = scmp.ne.s32.totalorder %s75, %s76
      %p90 = scmp.eq.s32.totalorder %s19, 3
      %p91 = por %p89, %p90
      %p93 = scmp.ne.s32.totalorder %s76, %s92
      %p94 = scmp.eq.s32.totalorder %s19, 0
      %p95 = por %p93, %p94
      %s96 = ssub.s32 %s21, %s35
      %s97 = ssub.s32 %s20, %s39
      %s98 = sor.u32 %s96, %s97
      %p99 = scmp.eq.s32.totalorder %s98, 0
      %s101 = sadd.s32 %s100, 1
      %s102 = scalar_select %p99, %s100, %s101
      %p105 = pneg %p99
      %p106 = scmp.eq.s32.totalorder %s13, 3
      %p107 = por %p105, %p106
      %p108 = scmp.ne.s32.totalorder %s100, %s103
      %p109 = scmp.eq.s32.totalorder %s13, 0
      %p110 = por %p108, %p109
      %p111 = scmp.ne.s32.totalorder %s100, %s103
      %p112 = scmp.eq.s32.totalorder %s18, 3
      %p113 = por %p111, %p112
      %p114 = scmp.ne.s32.totalorder %s103, %s104
      %p115 = scmp.eq.s32.totalorder %s18, 0
      %p116 = por %p114, %p115
      %p117 = scmp.ne.s32.totalorder %s103, %s104
      %p118 = scmp.eq.s32.totalorder %s19, 3
      %p119 = por %p117, %p118
      %p121 = scmp.ne.s32.totalorder %s104, %s120
      %p122 = scmp.eq.s32.totalorder %s19, 0
      %p123 = por %p121, %p122
      %s124 = ssub.s32 %s20, %s39
      %p125 = scmp.eq.s32.totalorder %s124, 0
      %s127 = sadd.s32 %s126, 1
      %s128 = scalar_select %p125, %s126, %s127
      %p131 = pneg %p125
      %p132 = scmp.eq.s32.totalorder %s13, 3
      %p133 = por %p131, %p132
      %p134 = scmp.ne.s32.totalorder %s126, %s129
      %p135 = scmp.eq.s32.totalorder %s13, 0
      %p136 = por %p134, %p135
      %p137 = scmp.ne.s32.totalorder %s126, %s129
      %p138 = scmp.eq.s32.totalorder %s18, 3
      %p139 = por %p137, %p138
      %p140 = scmp.ne.s32.totalorder %s129, %s130
      %p141 = scmp.eq.s32.totalorder %s18, 0
      %p142 = por %p140, %p141
      %p143 = scmp.ne.s32.totalorder %s129, %s130
      %p144 = scmp.eq.s32.totalorder %s19, 3
      %p145 = por %p143, %p144
      %p147 = scmp.ne.s32.totalorder %s130, %s146
      %p148 = scmp.eq.s32.totalorder %s19, 0
      %p149 = por %p147, %p148
      %s150 = ssub.s32 %s20, %s39
      %p151 = scmp.eq.s32.totalorder %s150, 0
      %s153 = sadd.s32 %s152, 1
      %s154 = scalar_select %p151, %s152, %s153
      %p157 = pneg %p151
      %p158 = scmp.eq.s32.totalorder %s13, 3
      %p159 = por %p157, %p158
      %p160 = scmp.ne.s32.totalorder %s152, %s155
      %p161 = scmp.eq.s32.totalorder %s13, 0
      %p162 = por %p160, %p161
      %p163 = scmp.ne.s32.totalorder %s152, %s155
      %p164 = scmp.eq.s32.totalorder %s18, 3
      %p165 = por %p163, %p164
      %p166 = scmp.ne.s32.totalorder %s155, %s156
      %p167 = scmp.eq.s32.totalorder %s18, 0
      %p168 = por %p166, %p167
      %p169 = scmp.ne.s32.totalorder %s155, %s156
      %p170 = scmp.eq.s32.totalorder %s19, 3
      %p171 = por %p169, %p170
      %p173 = scmp.ne.s32.totalorder %s156, %s172
      %p174 = scmp.eq.s32.totalorder %s19, 0
      %p175 = por %p173, %p174
      %p176 = scmp.le.s32.totalorder 1, %s13
      %p177 = scmp.lt.s32.totalorder %s13, 5
      %p178 = pnand %p176, %p177
      %p179 = pneg %p178
      // Predicated region
      $region9: #{tpu_custom_call.1} parent=5 // pred_check
        _
      $region10: #{tpu_custom_call.1} parent=5 // pred_check_branch
        %181 = sbr.rel (%p178) target = $region12
      $region11: #{tpu_custom_call.1} parent=5 // pred_region
        %s182 = ssub.s32 %s13, 1
        // Predicated region
        $region13: #{tpu_custom_call.1} parent=11 // pred_check
          %p183 = pneg %p88
        $region14: #{tpu_custom_call.1} parent=11 // pred_check_branch
          %185 = sbr.rel (%p183) target = $region16
        $region15: #{tpu_custom_call.1} parent=11 // pred_region
          %s186 = smul.u32 19, %s25
          %p187 = scmp.lt.s32.totalorder %s186, 18
          %s188 = scalar_select %p187, %s186, 18
          %p189 = scmp.lt.s32.totalorder %s23, 0
          %s190 = scalar_select %p189, %s23, 0
          %s191 = sadd.s32 %s190, %s188
          %s192 = smul.addr %s191, 4
          %s193 = scalar_lea.vmem %s1, %s192
          %s194 = smul.u32 19, %s25
        $region16: #{tpu_custom_call.1} parent=11 // pred_fallthru
          _
      $region12: #{tpu_custom_call.1} parent=5 // pred_fallthru
        _
      %p195 = scmp.lt.s32.totalorder %s13, 4
      // Predicated region
      $region17: #{tpu_custom_call.1} parent=5 // pred_check
        %p196 = pneg %p195
      $region18: #{tpu_custom_call.1} parent=5 // pred_check_branch
        %198 = sbr.rel (%p196) target = $region20
      $region19: #{tpu_custom_call.1} parent=5 // pred_region
        // Predicated region
        $region21: #{tpu_custom_call.1} parent=19 // pred_check
          %p199 = pneg %p54
        $region22: #{tpu_custom_call.1} parent=19 // pred_check_branch
          %201 = sbr.rel (%p199) target = $region24
        $region23: #{tpu_custom_call.1} parent=19 // pred_region
          %s202 = smul.u32 64, %s21
          %s203 = smul.u32 2, %s22
          %p204 = scmp.lt.s32.totalorder %s202, 255
          %s205 = scalar_select %p204, %s202, 255
          %p206 = scmp.lt.s32.totalorder %s203, 1
          %s207 = scalar_select %p206, %s203, 1
          %s208 = smul.addr %s205, 2
          %s209 = sadd.s32 %s207, %s208
          %s210 = smul.addr %s209, 4
          %s211 = scalar_lea.vmem %s0, %s210
          %s212 = smul.u32 64, %s21
          %s213 = smul.u32 2, %s22
        $region24: #{tpu_custom_call.1} parent=19 // pred_fallthru
          _
      $region20: #{tpu_custom_call.1} parent=5 // pred_fallthru
        _
      %p214 = scmp.le.s32.totalorder 1, %s13
      %p215 = scmp.lt.s32.totalorder %s13, 5
      %p216 = pnand %p214, %p215
      %p217 = pneg %p216
      // Predicated region
      $region25: #{tpu_custom_call.1} parent=5 // pred_check
        _
      $region26: #{tpu_custom_call.1} parent=5 // pred_check_branch
        %219 = sbr.rel (%p216) target = $region28
      $region27: #{tpu_custom_call.1} parent=5 // pred_region
        %s220 = ssub.s32 %s13, 1
        %s221 = smul.u32 64, %s24
        %s222 = smul.u32 2, %s25
        %p223 = scmp.lt.s32.totalorder %s221, 255
        %s224 = scalar_select %p223, %s221, 255
        %p225 = scmp.lt.s32.totalorder %s222, 1
        %s226 = scalar_select %p225, %s222, 1
        %s227 = smul.addr %s224, 2
        %s228 = sadd.s32 %s226, %s227
        %s229 = smul.addr %s228, 4
        %s230 = scalar_lea.vmem %s0, %s229
        %p231 = pneg %p60
        %p232 = pneg %p57
        %s233 = smul.u32 19, %s25
        %p234 = scmp.lt.s32.totalorder %s233, 18
        %s235 = scalar_select %p234, %s233, 18
        %p236 = scmp.lt.s32.totalorder %s23, 0
        %s237 = scalar_select %p236, %s23, 0
        %s238 = sadd.s32 %s237, %s235
        %s239 = smul.addr %s238, 4
        %s240 = scalar_lea.vmem %s1, %s239
        %p241 = pneg %p88
        %p242 = pneg %p85
        %p243 = pneg %p116
        %p244 = pneg %p113
        %s245 = smul.u32 64, %s24
        %p246 = scmp.lt.s32.totalorder %s245, 255
        %s247 = scalar_select %p246, %s245, 255
        %p248 = scmp.lt.s32.totalorder %s23, 0
        %s249 = scalar_select %p248, %s23, 0
        %s250 = sadd.s32 %s249, %s247
        %s251 = smul.addr %s250, 4
        %s252 = scalar_lea.vmem %s2, %s251
        %p253 = pneg %p142
        %p254 = pneg %p139
        %p255 = pneg %p168
        %p256 = pneg %p165
        %s257 = smul.u32 64, %s24
        %s258 = smul.u32 2, %s25
        %p259 = scmp.lt.s32.totalorder %s257, 255
        %s260 = scalar_select %p259, %s257, 255
        %p261 = scmp.lt.s32.totalorder %s258, 1
        %s262 = scalar_select %p261, %s258, 1
        %s263 = smul.addr %s260, 2
        %s264 = sadd.s32 %s262, %s263
        %s265 = smul.addr %s264, 4
        %s266 = scalar_lea.vmem %s0, %s265
        %s267 = smul.u32 64, %s24
        %s268 = smul.u32 2, %s25
        %s269 = smul.u32 19, %s25
        %p270 = scmp.lt.s32.totalorder %s269, 18
        %s271 = scalar_select %p270, %s269, 18
        %p272 = scmp.lt.s32.totalorder %s23, 0
        %s273 = scalar_select %p272, %s23, 0
        %s274 = sadd.s32 %s273, %s271
        %s275 = smul.addr %s274, 4
        %s276 = scalar_lea.vmem %s1, %s275
        %s277 = smul.u32 19, %s25
        %s278 = smul.u32 64, %s24
        %p279 = scmp.lt.s32.totalorder %s278, 255
        %s280 = scalar_select %p279, %s278, 255
        %p281 = scmp.lt.s32.totalorder %s23, 0
        %s282 = scalar_select %p281, %s23, 0
        %s283 = sadd.s32 %s282, %s280
        %s284 = smul.addr %s283, 4
        %s285 = scalar_lea.vmem %s2, %s284
        %s286 = smul.u32 64, %s24
        %p288 = scmp.eq.s32.totalorder %s25, 0
        // Predicated region
        $region29: #{tpu_custom_call.1} parent=27 // pred_check
          %p289 = pneg %p288
        $region30: #{tpu_custom_call.1} parent=27 // pred_check_branch
          %291 = sbr.rel (%p289) target = $region32
        $region31: #{tpu_custom_call.1} parent=27 // pred_region
          %vm292 = vcmask 523264
          %293 = vst.msk [vmem:[#allocation2] sm:$0xff] %vm292, 0.0
          %294 = vst.msk [vmem:[#allocation2 + $0x8] sm:$0xff] %vm292, 0.0
          %295 = vst.msk [vmem:[#allocation2 + $0x10] sm:$0xff] %vm292, 0.0
          %296 = vst.msk [vmem:[#allocation2 + $0x18] sm:$0xff] %vm292, 0.0
          %297 = vst.msk [vmem:[#allocation2 + $0x20] sm:$0xff] %vm292, 0.0
          %298 = vst.msk [vmem:[#allocation2 + $0x28] sm:$0xff] %vm292, 0.0
          %299 = vst.msk [vmem:[#allocation2 + $0x30] sm:$0xff] %vm292, 0.0
          %300 = vst.msk [vmem:[#allocation2 + $0x38] sm:$0xff] %vm292, 0.0
          %301 = vst.msk [vmem:[#allocation2 + $0x40] sm:$0xff] %vm292, 0.0
          %302 = vst.msk [vmem:[#allocation2 + $0x48] sm:$0xff] %vm292, 0.0
          %303 = vst.msk [vmem:[#allocation2 + $0x50] sm:$0xff] %vm292, 0.0
          %304 = vst.msk [vmem:[#allocation2 + $0x58] sm:$0xff] %vm292, 0.0
          %305 = vst.msk [vmem:[#allocation2 + $0x60] sm:$0xff] %vm292, 0.0
          %306 = vst.msk [vmem:[#allocation2 + $0x68] sm:$0xff] %vm292, 0.0
          %307 = vst.msk [vmem:[#allocation2 + $0x70] sm:$0xff] %vm292, 0.0
          %308 = vst.msk [vmem:[#allocation2 + $0x78] sm:$0xff] %vm292, 0.0
          %309 = vst.msk [vmem:[#allocation2 + $0x80] sm:$0xff] %vm292, 0.0
          %310 = vst.msk [vmem:[#allocation2 + $0x88] sm:$0xff] %vm292, 0.0
          %311 = vst.msk [vmem:[#allocation2 + $0x90] sm:$0xff] %vm292, 0.0
          %312 = vst.msk [vmem:[#allocation2 + $0x98] sm:$0xff] %vm292, 0.0
          %313 = vst.msk [vmem:[#allocation2 + $0xa0] sm:$0xff] %vm292, 0.0
          %314 = vst.msk [vmem:[#allocation2 + $0xa8] sm:$0xff] %vm292, 0.0
          %315 = vst.msk [vmem:[#allocation2 + $0xb0] sm:$0xff] %vm292, 0.0
          %316 = vst.msk [vmem:[#allocation2 + $0xb8] sm:$0xff] %vm292, 0.0
          %317 = vst.msk [vmem:[#allocation2 + $0xc0] sm:$0xff] %vm292, 0.0
          %318 = vst.msk [vmem:[#allocation2 + $0xc8] sm:$0xff] %vm292, 0.0
          %319 = vst.msk [vmem:[#allocation2 + $0xd0] sm:$0xff] %vm292, 0.0
          %320 = vst.msk [vmem:[#allocation2 + $0xd8] sm:$0xff] %vm292, 0.0
          %321 = vst.msk [vmem:[#allocation2 + $0xe0] sm:$0xff] %vm292, 0.0
          %322 = vst.msk [vmem:[#allocation2 + $0xe8] sm:$0xff] %vm292, 0.0
          %323 = vst.msk [vmem:[#allocation2 + $0xf0] sm:$0xff] %vm292, 0.0
          %324 = vst.msk [vmem:[#allocation2 + $0xf8] sm:$0xff] %vm292, 0.0
          %325 = vst.msk [vmem:[#allocation2 + $0x100] sm:$0xff] %vm292, 0.0
          %326 = vst.msk [vmem:[#allocation2 + $0x108] sm:$0xff] %vm292, 0.0
          %327 = vst.msk [vmem:[#allocation2 + $0x110] sm:$0xff] %vm292, 0.0
          %328 = vst.msk [vmem:[#allocation2 + $0x118] sm:$0xff] %vm292, 0.0
          %329 = vst.msk [vmem:[#allocation2 + $0x120] sm:$0xff] %vm292, 0.0
          %330 = vst.msk [vmem:[#allocation2 + $0x128] sm:$0xff] %vm292, 0.0
          %331 = vst.msk [vmem:[#allocation2 + $0x130] sm:$0xff] %vm292, 0.0
          %332 = vst.msk [vmem:[#allocation2 + $0x138] sm:$0xff] %vm292, 0.0
          %333 = vst.msk [vmem:[#allocation2 + $0x140] sm:$0xff] %vm292, 0.0
          %334 = vst.msk [vmem:[#allocation2 + $0x148] sm:$0xff] %vm292, 0.0
          %335 = vst.msk [vmem:[#allocation2 + $0x150] sm:$0xff] %vm292, 0.0
          %336 = vst.msk [vmem:[#allocation2 + $0x158] sm:$0xff] %vm292, 0.0
          %337 = vst.msk [vmem:[#allocation2 + $0x160] sm:$0xff] %vm292, 0.0
          %338 = vst.msk [vmem:[#allocation2 + $0x168] sm:$0xff] %vm292, 0.0
          %339 = vst.msk [vmem:[#allocation2 + $0x170] sm:$0xff] %vm292, 0.0
          %340 = vst.msk [vmem:[#allocation2 + $0x178] sm:$0xff] %vm292, 0.0
          %341 = vst.msk [vmem:[#allocation2 + $0x180] sm:$0xff] %vm292, 0.0
          %342 = vst.msk [vmem:[#allocation2 + $0x188] sm:$0xff] %vm292, 0.0
          %343 = vst.msk [vmem:[#allocation2 + $0x190] sm:$0xff] %vm292, 0.0
          %344 = vst.msk [vmem:[#allocation2 + $0x198] sm:$0xff] %vm292, 0.0
          %345 = vst.msk [vmem:[#allocation2 + $0x1a0] sm:$0xff] %vm292, 0.0
          %346 = vst.msk [vmem:[#allocation2 + $0x1a8] sm:$0xff] %vm292, 0.0
          %347 = vst.msk [vmem:[#allocation2 + $0x1b0] sm:$0xff] %vm292, 0.0
          %348 = vst.msk [vmem:[#allocation2 + $0x1b8] sm:$0xff] %vm292, 0.0
          %349 = vst.msk [vmem:[#allocation2 + $0x1c0] sm:$0xff] %vm292, 0.0
          %350 = vst.msk [vmem:[#allocation2 + $0x1c8] sm:$0xff] %vm292, 0.0
          %351 = vst.msk [vmem:[#allocation2 + $0x1d0] sm:$0xff] %vm292, 0.0
          %352 = vst.msk [vmem:[#allocation2 + $0x1d8] sm:$0xff] %vm292, 0.0
          %353 = vst.msk [vmem:[#allocation2 + $0x1e0] sm:$0xff] %vm292, 0.0
          %354 = vst.msk [vmem:[#allocation2 + $0x1e8] sm:$0xff] %vm292, 0.0
          %355 = vst.msk [vmem:[#allocation2 + $0x1f0] sm:$0xff] %vm292, 0.0
          %356 = vst.msk [vmem:[#allocation2 + $0x1f8] sm:$0xff] %vm292, 0.0
        $region32: #{tpu_custom_call.1} parent=27 // pred_fallthru
          _
        %v357 = vld [vmem:[#allocation2] sm:$0xff]
        %v358 = vld [vmem:[#allocation2 + $0x8] sm:$0xff]
        %v359 = vld [vmem:[#allocation2 + $0x10] sm:$0xff]
        %v360 = vld [vmem:[#allocation2 + $0x18] sm:$0xff]
        %v361 = vld [vmem:[#allocation2 + $0x20] sm:$0xff]
        %v362 = vld [vmem:[#allocation2 + $0x28] sm:$0xff]
        %v363 = vld [vmem:[#allocation2 + $0x30] sm:$0xff]
        %v364 = vld [vmem:[#allocation2 + $0x38] sm:$0xff]
        %v365 = vld [vmem:[#allocation2 + $0x40] sm:$0xff]
        %v366 = vld [vmem:[#allocation2 + $0x48] sm:$0xff]
        %v367 = vld [vmem:[#allocation2 + $0x50] sm:$0xff]
        %v368 = vld [vmem:[#allocation2 + $0x58] sm:$0xff]
        %v369 = vld [vmem:[#allocation2 + $0x60] sm:$0xff]
        %v370 = vld [vmem:[#allocation2 + $0x68] sm:$0xff]
        %v371 = vld [vmem:[#allocation2 + $0x70] sm:$0xff]
        %v372 = vld [vmem:[#allocation2 + $0x78] sm:$0xff]
        %v373 = vld [vmem:[#allocation2 + $0x80] sm:$0xff]
        %v374 = vld [vmem:[#allocation2 + $0x88] sm:$0xff]
        %v375 = vld [vmem:[#allocation2 + $0x90] sm:$0xff]
        %v376 = vld [vmem:[#allocation2 + $0x98] sm:$0xff]
        %v377 = vld [vmem:[#allocation2 + $0xa0] sm:$0xff]
        %v378 = vld [vmem:[#allocation2 + $0xa8] sm:$0xff]
        %v379 = vld [vmem:[#allocation2 + $0xb0] sm:$0xff]
        %v380 = vld [vmem:[#allocation2 + $0xb8] sm:$0xff]
        %v381 = vld [vmem:[#allocation2 + $0xc0] sm:$0xff]
        %v382 = vld [vmem:[#allocation2 + $0xc8] sm:$0xff]
        %v383 = vld [vmem:[#allocation2 + $0xd0] sm:$0xff]
        %v384 = vld [vmem:[#allocation2 + $0xd8] sm:$0xff]
        %v385 = vld [vmem:[#allocation2 + $0xe0] sm:$0xff]
        %v386 = vld [vmem:[#allocation2 + $0xe8] sm:$0xff]
        %v387 = vld [vmem:[#allocation2 + $0xf0] sm:$0xff]
        %v388 = vld [vmem:[#allocation2 + $0xf8] sm:$0xff]
        %v389 = vld [vmem:[#allocation2 + $0x100] sm:$0xff]
        %v390 = vld [vmem:[#allocation2 + $0x108] sm:$0xff]
        %v391 = vld [vmem:[#allocation2 + $0x110] sm:$0xff]
        %v392 = vld [vmem:[#allocation2 + $0x118] sm:$0xff]
        %v393 = vld [vmem:[#allocation2 + $0x120] sm:$0xff]
        %v394 = vld [vmem:[#allocation2 + $0x128] sm:$0xff]
        %v395 = vld [vmem:[#allocation2 + $0x130] sm:$0xff]
        %v396 = vld [vmem:[#allocation2 + $0x138] sm:$0xff]
        %v397 = vld [vmem:[#allocation2 + $0x140] sm:$0xff]
        %v398 = vld [vmem:[#allocation2 + $0x148] sm:$0xff]
        %v399 = vld [vmem:[#allocation2 + $0x150] sm:$0xff]
        %v400 = vld [vmem:[#allocation2 + $0x158] sm:$0xff]
        %v401 = vld [vmem:[#allocation2 + $0x160] sm:$0xff]
        %v402 = vld [vmem:[#allocation2 + $0x168] sm:$0xff]
        %v403 = vld [vmem:[#allocation2 + $0x170] sm:$0xff]
        %v404 = vld [vmem:[#allocation2 + $0x178] sm:$0xff]
        %v405 = vld [vmem:[#allocation2 + $0x180] sm:$0xff]
        %v406 = vld [vmem:[#allocation2 + $0x188] sm:$0xff]
        %v407 = vld [vmem:[#allocation2 + $0x190] sm:$0xff]
        %v408 = vld [vmem:[#allocation2 + $0x198] sm:$0xff]
        %v409 = vld [vmem:[#allocation2 + $0x1a0] sm:$0xff]
        %v410 = vld [vmem:[#allocation2 + $0x1a8] sm:$0xff]
        %v411 = vld [vmem:[#allocation2 + $0x1b0] sm:$0xff]
        %v412 = vld [vmem:[#allocation2 + $0x1b8] sm:$0xff]
        %v413 = vld [vmem:[#allocation2 + $0x1c0] sm:$0xff]
        %v414 = vld [vmem:[#allocation2 + $0x1c8] sm:$0xff]
        %v415 = vld [vmem:[#allocation2 + $0x1d0] sm:$0xff]
        %v416 = vld [vmem:[#allocation2 + $0x1d8] sm:$0xff]
        %v417 = vld [vmem:[#allocation2 + $0x1e0] sm:$0xff]
        %v418 = vld [vmem:[#allocation2 + $0x1e8] sm:$0xff]
        %v419 = vld [vmem:[#allocation2 + $0x1f0] sm:$0xff]
        %v420 = vld [vmem:[#allocation2 + $0x1f8] sm:$0xff]
        %v421 = vld [vmem:[%s266] sm:$0xff]
        %v422 = vld [vmem:[%s266 + $0x8] sm:$0xff]
        %v423 = vld [vmem:[%s266 + $0x10] sm:$0xff]
        %v424 = vld [vmem:[%s266 + $0x18] sm:$0xff]
        %v425 = vld [vmem:[%s266 + $0x20] sm:$0xff]
        %v426 = vld [vmem:[%s266 + $0x28] sm:$0xff]
        %v427 = vld [vmem:[%s266 + $0x30] sm:$0xff]
        %v428 = vld [vmem:[%s266 + $0x38] sm:$0xff]
        %v429 = vld [vmem:[%s266 + $0x40] sm:$0xff]
        %v430 = vld [vmem:[%s266 + $0x48] sm:$0xff]
        %v431 = vld [vmem:[%s266 + $0x50] sm:$0xff]
        %v432 = vld [vmem:[%s266 + $0x58] sm:$0xff]
        %v433 = vld [vmem:[%s266 + $0x60] sm:$0xff]
        %v434 = vld [vmem:[%s266 + $0x68] sm:$0xff]
        %v435 = vld [vmem:[%s266 + $0x70] sm:$0xff]
        %v436 = vld [vmem:[%s266 + $0x78] sm:$0xff]
        %v437 = vld [vmem:[%s266 + $0x80] sm:$0xff]
        %v438 = vld [vmem:[%s266 + $0x88] sm:$0xff]
        %v439 = vld [vmem:[%s266 + $0x90] sm:$0xff]
        %v440 = vld [vmem:[%s266 + $0x98] sm:$0xff]
        %v441 = vld [vmem:[%s266 + $0xa0] sm:$0xff]
        %v442 = vld [vmem:[%s266 + $0xa8] sm:$0xff]
        %v443 = vld [vmem:[%s266 + $0xb0] sm:$0xff]
        %v444 = vld [vmem:[%s266 + $0xb8] sm:$0xff]
        %v445 = vld [vmem:[%s266 + $0xc0] sm:$0xff]
        %v446 = vld [vmem:[%s266 + $0xc8] sm:$0xff]
        %v447 = vld [vmem:[%s266 + $0xd0] sm:$0xff]
        %v448 = vld [vmem:[%s266 + $0xd8] sm:$0xff]
        %v449 = vld [vmem:[%s266 + $0xe0] sm:$0xff]
        %v450 = vld [vmem:[%s266 + $0xe8] sm:$0xff]
        %v451 = vld [vmem:[%s266 + $0xf0] sm:$0xff]
        %v452 = vld [vmem:[%s266 + $0xf8] sm:$0xff]
        %v453 = vld [vmem:[%s266 + $0x100] sm:$0xff]
        %v454 = vld [vmem:[%s266 + $0x108] sm:$0xff]
        %v455 = vld [vmem:[%s266 + $0x110] sm:$0xff]
        %v456 = vld [vmem:[%s266 + $0x118] sm:$0xff]
        %v457 = vld [vmem:[%s266 + $0x120] sm:$0xff]
        %v458 = vld [vmem:[%s266 + $0x128] sm:$0xff]
        %v459 = vld [vmem:[%s266 + $0x130] sm:$0xff]
        %v460 = vld [vmem:[%s266 + $0x138] sm:$0xff]
        %v461 = vld [vmem:[%s266 + $0x140] sm:$0xff]
        %v462 = vld [vmem:[%s266 + $0x148] sm:$0xff]
        %v463 = vld [vmem:[%s266 + $0x150] sm:$0xff]
        %v464 = vld [vmem:[%s266 + $0x158] sm:$0xff]
        %v465 = vld [vmem:[%s266 + $0x160] sm:$0xff]
        %v466 = vld [vmem:[%s266 + $0x168] sm:$0xff]
        %v467 = vld [vmem:[%s266 + $0x170] sm:$0xff]
        %v468 = vld [vmem:[%s266 + $0x178] sm:$0xff]
        %v469 = vld [vmem:[%s266 + $0x180] sm:$0xff]
        %v470 = vld [vmem:[%s266 + $0x188] sm:$0xff]
        %v471 = vld [vmem:[%s266 + $0x190] sm:$0xff]
        %v472 = vld [vmem:[%s266 + $0x198] sm:$0xff]
        %v473 = vld [vmem:[%s266 + $0x1a0] sm:$0xff]
        %v474 = vld [vmem:[%s266 + $0x1a8] sm:$0xff]
        %v475 = vld [vmem:[%s266 + $0x1b0] sm:$0xff]
        %v476 = vld [vmem:[%s266 + $0x1b8] sm:$0xff]
        %v477 = vld [vmem:[%s266 + $0x1c0] sm:$0xff]
        %v478 = vld [vmem:[%s266 + $0x1c8] sm:$0xff]
        %v479 = vld [vmem:[%s266 + $0x1d0] sm:$0xff]
        %v480 = vld [vmem:[%s266 + $0x1d8] sm:$0xff]
        %v481 = vld [vmem:[%s266 + $0x1e0] sm:$0xff]
        %v482 = vld [vmem:[%s266 + $0x1e8] sm:$0xff]
        %v483 = vld [vmem:[%s266 + $0x1f0] sm:$0xff]
        %v484 = vld [vmem:[%s266 + $0x1f8] sm:$0xff]
        %v485 = vld [vmem:[%s276] sm:$0xf]
        %v486 = vld [vmem:[%s276 + $0x4] sm:$0xf]
        %v487 = vld [vmem:[%s276 + $0x8] sm:$0xf]
        %v488 = vld [vmem:[%s276 + $0xc] sm:$0xf]
        %v489 = vld [vmem:[%s276 + $0x10] sm:$0xf]
        %v490 = vld [vmem:[%s276 + $0x14] sm:$0xf]
        %v491 = vld [vmem:[%s276 + $0x18] sm:$0xf]
        %v492 = vld [vmem:[%s276 + $0x1c] sm:$0xf]
        %v493 = vld [vmem:[%s276 + $0x20] sm:$0xf]
        %v494 = vld [vmem:[%s276 + $0x24] sm:$0xf]
        %v495 = vld [vmem:[%s276 + $0x28] sm:$0xf]
        %v496 = vld [vmem:[%s276 + $0x2c] sm:$0xf]
        %v497 = vld [vmem:[%s276 + $0x30] sm:$0xf]
        %v498 = vld [vmem:[%s276 + $0x34] sm:$0xf]
        %v499 = vld [vmem:[%s276 + $0x38] sm:$0xf]
        %v500 = vld [vmem:[%s276 + $0x3c] sm:$0xf]
        %v501 = vld [vmem:[%s276 + $0x40] sm:$0xf]
        %v502 = vld [vmem:[%s276 + $0x44] sm:$0xf]
        %v503 = vld [vmem:[%s276 + $0x48] sm:$0x3]
        %v568 = vunpack.c.l.b16 %v421
        %v569 = vunpack.c.h.b16 %v421
        %v570 = vunpack.c.l.b16 %v422
        %v571 = vunpack.c.h.b16 %v422
        %v572 = vunpack.c.l.b16 %v423
        %v573 = vunpack.c.h.b16 %v423
        %v574 = vunpack.c.l.b16 %v424
        %v575 = vunpack.c.h.b16 %v424
        %v576 = vunpack.c.l.b16 %v425
        %v577 = vunpack.c.h.b16 %v425
        %v578 = vunpack.c.l.b16 %v426
        %v579 = vunpack.c.h.b16 %v426
        %v580 = vunpack.c.l.b16 %v427
        %v581 = vunpack.c.h.b16 %v427
        %v582 = vunpack.c.l.b16 %v428
        %v583 = vunpack.c.h.b16 %v428
        %v584 = vunpack.c.l.b16 %v429
        %v585 = vunpack.c.h.b16 %v429
        %v586 = vunpack.c.l.b16 %v430
        %v587 = vunpack.c.h.b16 %v430
        %v588 = vunpack.c.l.b16 %v431
        %v589 = vunpack.c.h.b16 %v431
        %v590 = vunpack.c.l.b16 %v432
        %v591 = vunpack.c.h.b16 %v432
        %v592 = vunpack.c.l.b16 %v433
        %v593 = vunpack.c.h.b16 %v433
        %v594 = vunpack.c.l.b16 %v434
        %v595 = vunpack.c.h.b16 %v434
        %v596 = vunpack.c.l.b16 %v435
        %v597 = vunpack.c.h.b16 %v435
        %v598 = vunpack.c.l.b16 %v436
        %v599 = vunpack.c.h.b16 %v436
        %v600 = vunpack.c.l.b16 %v437
        %v601 = vunpack.c.h.b16 %v437
        %v602 = vunpack.c.l.b16 %v438
        %v603 = vunpack.c.h.b16 %v438
        %v604 = vunpack.c.l.b16 %v439
        %v605 = vunpack.c.h.b16 %v439
        %v606 = vunpack.c.l.b16 %v440
        %v607 = vunpack.c.h.b16 %v440
        %v608 = vunpack.c.l.b16 %v441
        %v609 = vunpack.c.h.b16 %v441
        %v610 = vunpack.c.l.b16 %v442
        %v611 = vunpack.c.h.b16 %v442
        %v612 = vunpack.c.l.b16 %v443
        %v613 = vunpack.c.h.b16 %v443
        %v614 = vunpack.c.l.b16 %v444
        %v615 = vunpack.c.h.b16 %v444
        %v616 = vunpack.c.l.b16 %v445
        %v617 = vunpack.c.h.b16 %v445
        %v618 = vunpack.c.l.b16 %v446
        %v619 = vunpack.c.h.b16 %v446
        %v620 = vunpack.c.l.b16 %v447
        %v621 = vunpack.c.h.b16 %v447
        %v622 = vunpack.c.l.b16 %v448
        %v623 = vunpack.c.h.b16 %v448
        %v624 = vunpack.c.l.b16 %v449
        %v625 = vunpack.c.h.b16 %v449
        %v626 = vunpack.c.l.b16 %v450
        %v627 = vunpack.c.h.b16 %v450
        %v628 = vunpack.c.l.b16 %v451
        %v629 = vunpack.c.h.b16 %v451
        %v630 = vunpack.c.l.b16 %v452
        %v631 = vunpack.c.h.b16 %v452
        %v632 = vunpack.c.l.b16 %v453
        %v633 = vunpack.c.h.b16 %v453
        %v634 = vunpack.c.l.b16 %v454
        %v635 = vunpack.c.h.b16 %v454
        %v636 = vunpack.c.l.b16 %v455
        %v637 = vunpack.c.h.b16 %v455
        %v638 = vunpack.c.l.b16 %v456
        %v639 = vunpack.c.h.b16 %v456
        %v640 = vunpack.c.l.b16 %v457
        %v641 = vunpack.c.h.b16 %v457
        %v642 = vunpack.c.l.b16 %v458
        %v643 = vunpack.c.h.b16 %v458
        %v644 = vunpack.c.l.b16 %v459
        %v645 = vunpack.c.h.b16 %v459
        %v646 = vunpack.c.l.b16 %v460
        %v647 = vunpack.c.h.b16 %v460
        %v648 = vunpack.c.l.b16 %v461
        %v649 = vunpack.c.h.b16 %v461
        %v650 = vunpack.c.l.b16 %v462
        %v651 = vunpack.c.h.b16 %v462
        %v652 = vunpack.c.l.b16 %v463
        %v653 = vunpack.c.h.b16 %v463
        %v654 = vunpack.c.l.b16 %v464
        %v655 = vunpack.c.h.b16 %v464
        %v656 = vunpack.c.l.b16 %v465
        %v657 = vunpack.c.h.b16 %v465
        %v658 = vunpack.c.l.b16 %v466
        %v659 = vunpack.c.h.b16 %v466
        %v660 = vunpack.c.l.b16 %v467
        %v661 = vunpack.c.h.b16 %v467
        %v662 = vunpack.c.l.b16 %v468
        %v663 = vunpack.c.h.b16 %v468
        %v664 = vunpack.c.l.b16 %v469
        %v665 = vunpack.c.h.b16 %v469
        %v666 = vunpack.c.l.b16 %v470
        %v667 = vunpack.c.h.b16 %v470
        %v668 = vunpack.c.l.b16 %v471
        %v669 = vunpack.c.h.b16 %v471
        %v670 = vunpack.c.l.b16 %v472
        %v671 = vunpack.c.h.b16 %v472
        %v672 = vunpack.c.l.b16 %v473
        %v673 = vunpack.c.h.b16 %v473
        %v674 = vunpack.c.l.b16 %v474
        %v675 = vunpack.c.h.b16 %v474
        %v676 = vunpack.c.l.b16 %v475
        %v677 = vunpack.c.h.b16 %v475
        %v678 = vunpack.c.l.b16 %v476
        %v679 = vunpack.c.h.b16 %v476
        %v680 = vunpack.c.l.b16 %v477
        %v681 = vunpack.c.h.b16 %v477
        %v682 = vunpack.c.l.b16 %v478
        %v683 = vunpack.c.h.b16 %v478
        %v684 = vunpack.c.l.b16 %v479
        %v685 = vunpack.c.h.b16 %v479
        %v686 = vunpack.c.l.b16 %v480
        %v687 = vunpack.c.h.b16 %v480
        %v688 = vunpack.c.l.b16 %v481
        %v689 = vunpack.c.h.b16 %v481
        %v690 = vunpack.c.l.b16 %v482
        %v691 = vunpack.c.h.b16 %v482
        %v692 = vunpack.c.l.b16 %v483
        %v693 = vunpack.c.h.b16 %v483
        %v694 = vunpack.c.l.b16 %v484
        %v695 = vunpack.c.h.b16 %v484
        %v696 = vpack.c.b16 %v570, %v568
        %v697 = vpack.c.b16 %v571, %v569
        %v698 = vpack.c.b16 %v574, %v572
        %v699 = vpack.c.b16 %v575, %v573
        %v700 = vpack.c.b16 %v578, %v576
        %v701 = vpack.c.b16 %v579, %v577
        %v702 = vpack.c.b16 %v582, %v580
        %v703 = vpack.c.b16 %v583, %v581
        %v704 = vpack.c.b16 %v586, %v584
        %v705 = vpack.c.b16 %v587, %v585
        %v706 = vpack.c.b16 %v590, %v588
        %v707 = vpack.c.b16 %v591, %v589
        %v708 = vpack.c.b16 %v594, %v592
        %v709 = vpack.c.b16 %v595, %v593
        %v710 = vpack.c.b16 %v598, %v596
        %v711 = vpack.c.b16 %v599, %v597
        %v712 = vpack.c.b16 %v602, %v600
        %v713 = vpack.c.b16 %v603, %v601
        %v714 = vpack.c.b16 %v606, %v604
        %v715 = vpack.c.b16 %v607, %v605
        %v716 = vpack.c.b16 %v610, %v608
        %v717 = vpack.c.b16 %v611, %v609
        %v718 = vpack.c.b16 %v614, %v612
        %v719 = vpack.c.b16 %v615, %v613
        %v720 = vpack.c.b16 %v618, %v616
        %v721 = vpack.c.b16 %v619, %v617
        %v722 = vpack.c.b16 %v622, %v620
        %v723 = vpack.c.b16 %v623, %v621
        %v724 = vpack.c.b16 %v626, %v624
        %v725 = vpack.c.b16 %v627, %v625
        %v726 = vpack.c.b16 %v630, %v628
        %v727 = vpack.c.b16 %v631, %v629
        %v728 = vpack.c.b16 %v634, %v632
        %v729 = vpack.c.b16 %v635, %v633
        %v730 = vpack.c.b16 %v638, %v636
        %v731 = vpack.c.b16 %v639, %v637
        %v732 = vpack.c.b16 %v642, %v640
        %v733 = vpack.c.b16 %v643, %v641
        %v734 = vpack.c.b16 %v646, %v644
        %v735 = vpack.c.b16 %v647, %v645
        %v736 = vpack.c.b16 %v650, %v648
        %v737 = vpack.c.b16 %v651, %v649
        %v738 = vpack.c.b16 %v654, %v652
        %v739 = vpack.c.b16 %v655, %v653
        %v740 = vpack.c.b16 %v658, %v656
        %v741 = vpack.c.b16 %v659, %v657
        %v742 = vpack.c.b16 %v662, %v660
        %v743 = vpack.c.b16 %v663, %v661
        %v744 = vpack.c.b16 %v666, %v664
        %v745 = vpack.c.b16 %v667, %v665
        %v746 = vpack.c.b16 %v670, %v668
        %v747 = vpack.c.b16 %v671, %v669
        %v748 = vpack.c.b16 %v674, %v672
        %v749 = vpack.c.b16 %v675, %v673
        %v750 = vpack.c.b16 %v678, %v676
        %v751 = vpack.c.b16 %v679, %v677
        %v752 = vpack.c.b16 %v682, %v680
        %v753 = vpack.c.b16 %v683, %v681
        %v754 = vpack.c.b16 %v686, %v684
        %v755 = vpack.c.b16 %v687, %v685
        %v756 = vpack.c.b16 %v690, %v688
        %v757 = vpack.c.b16 %v691, %v689
        %v758 = vpack.c.b16 %v694, %v692
        %v759 = vpack.c.b16 %v695, %v693
        %v811 = vunpack.c.l.b16 %v485
        %v812 = vunpack.c.l.b16 %v486
        %v813 = vunpack.c.l.b16 %v487
        %v814 = vunpack.c.l.b16 %v488
        %v815 = vunpack.c.l.b16 %v489
        %v816 = vunpack.c.l.b16 %v490
        %v817 = vunpack.c.l.b16 %v491
        %v818 = vunpack.c.l.b16 %v492
        %v819 = vunpack.c.l.b16 %v493
        %v820 = vunpack.c.l.b16 %v494
        %v821 = vunpack.c.l.b16 %v495
        %v822 = vunpack.c.l.b16 %v496
        %v823 = vunpack.c.l.b16 %v497
        %v824 = vunpack.c.l.b16 %v498
        %v825 = vunpack.c.l.b16 %v499
        %v826 = vunpack.c.l.b16 %v500
        %v827 = vunpack.c.l.b16 %v501
        %v828 = vunpack.c.l.b16 %v502
        %v829 = vunpack.c.l.b16 %v503
        %v830 = vpack.c.b16 %v812, %v811
        %v831 = vpack.c.b16 %v814, %v813
        %v832 = vpack.c.b16 %v816, %v815
        %v833 = vpack.c.b16 %v818, %v817
        %v834 = vpack.c.b16 %v820, %v819
        %v835 = vpack.c.b16 %v822, %v821
        %v836 = vpack.c.b16 %v824, %v823
        %v837 = vpack.c.b16 %v826, %v825
        %v838 = vpack.c.b16 %v828, %v827
        %v839 = vpack.c.b16 %v829, %v829
        %vm849 = vcmask 154624
        %v851 = vsel %vm849, %v697, 0
        %v854 = vsel %vm849, %v699, 0
        %v857 = vsel %vm849, %v701, 0
        %v860 = vsel %vm849, %v703, 0
        %v863 = vsel %vm849, %v705, 0
        %v866 = vsel %vm849, %v707, 0
        %v869 = vsel %vm849, %v709, 0
        %v872 = vsel %vm849, %v711, 0
        %v875 = vsel %vm849, %v713, 0
        %v878 = vsel %vm849, %v715, 0
        %v881 = vsel %vm849, %v717, 0
        %v884 = vsel %vm849, %v719, 0
        %v887 = vsel %vm849, %v721, 0
        %v890 = vsel %vm849, %v723, 0
        %v893 = vsel %vm849, %v725, 0
        %v896 = vsel %vm849, %v727, 0
        %v899 = vsel %vm849, %v729, 0
        %v902 = vsel %vm849, %v731, 0
        %v905 = vsel %vm849, %v733, 0
        %v908 = vsel %vm849, %v735, 0
        %v911 = vsel %vm849, %v737, 0
        %v914 = vsel %vm849, %v739, 0
        %v917 = vsel %vm849, %v741, 0
        %v920 = vsel %vm849, %v743, 0
        %v923 = vsel %vm849, %v745, 0
        %v926 = vsel %vm849, %v747, 0
        %v929 = vsel %vm849, %v749, 0
        %v932 = vsel %vm849, %v751, 0
        %v935 = vsel %vm849, %v753, 0
        %v938 = vsel %vm849, %v755, 0
        %v941 = vsel %vm849, %v757, 0
        %v944 = vsel %vm849, %v759, 0
        %vm946 = vcmask 1040384
        %vm947 = vcmask 1041408
        %v948 = vsel %vm946, 4294967295, 65535
        %v949 = vsel %vm947, %v948, 0
        %v951 = vand.u32 %v839, %v949
        %953 = vmatprep.subr.bf16.mxu0 0
        %954 = vmatpush1.bf16.msra.mxu0 %v830
        %955 = vmatprep.subr.bf16.mxu0 0
        %956 = vmatpush1.bf16.msra.mxu0 %v831
        %957 = vmatprep.subr.bf16.mxu0 0
        %958 = vmatpush1.bf16.msra.mxu0 %v832
        %959 = vmatprep.subr.bf16.mxu0 0
        %960 = vmatpush1.bf16.msra.mxu0 %v833
        %961 = vmatprep.subr.bf16.mxu0 0
        %962 = vmatpush1.bf16.msra.mxu0 %v834
        %963 = vmatprep.subr.bf16.mxu0 0
        %964 = vmatpush1.bf16.msra.mxu0 %v835
        %965 = vmatprep.subr.bf16.mxu0 0
        %966 = vmatpush1.bf16.msra.mxu0 %v836
        %967 = vmatprep.subr.bf16.mxu0 0
        %968 = vmatpush1.bf16.msra.mxu0 %v837
        %969 = vmatprep.subr.bf16.mxu0 0
        %970 = vmatpush1.bf16.msra.mxu0 %v838
        %971 = vmatprep.subr.bf16.mxu0 0
        %972 = vmatpush1.bf16.msra.mxu0 %v951
        %973 = vmatprep.subr.bf16.mxu0 0
        %974 = vmatpush1.bf16.msra.mxu0 0
        %975 = vmatprep.subr.bf16.mxu0 0
        %976 = vmatpush1.bf16.msra.mxu0 0
        %977 = vmatprep.subr.bf16.mxu0 0
        %978 = vmatpush1.bf16.msra.mxu0 0
        %979 = vmatprep.subr.bf16.mxu0 0
        %980 = vmatpush1.bf16.msra.mxu0 0
        %981 = vmatprep.subr.bf16.mxu0 0
        %982 = vmatpush1.bf16.msra.mxu0 0
        %983 = vmatprep.subr.bf16.mxu0 0
        %984 = vmatpush1.bf16.msra.mxu0 0
        %985 = vmatprep.mubr.bf16.mxu0 %v851
        %986 = vmatmul.mubr.bf16.gmra.mrb[0].mxu0 %v696
        %v987 = vpop.f32.mrb[0].mxu0
        %v988 = vadd.f32 0.0, %v987
        %v989 = vpop.f32.mrb[0].mxu0
        %v990 = vpop.f32.mrb[0].mxu0
        %v991 = vadd.f32 0.0, %v990
        %v992 = vpop.f32.mrb[0].mxu0
        %993 = vmatprep.mubr.bf16.mxu0 %v854
        %994 = vmatmul.mubr.bf16.gmra.mrb[0].mxu0 %v698
        %v995 = vpop.f32.mrb[0].mxu0
        %v996 = vadd.f32 0.0, %v995
        %v997 = vpop.f32.mrb[0].mxu0
        %v998 = vpop.f32.mrb[0].mxu0
        %v999 = vadd.f32 0.0, %v998
        %v1000 = vpop.f32.mrb[0].mxu0
        %1001 = vmatprep.mubr.bf16.mxu0 %v857
        %1002 = vmatmul.mubr.bf16.gmra.mrb[0].mxu0 %v700
        %v1003 = vpop.f32.mrb[0].mxu0
        %v1004 = vadd.f32 0.0, %v1003
        %v1005 = vpop.f32.mrb[0].mxu0
        %v1006 = vpop.f32.mrb[0].mxu0
        %v1007 = vadd.f32 0.0, %v1006
        %v1008 = vpop.f32.mrb[0].mxu0
        %1009 = vmatprep.mubr.bf16.mxu0 %v860
        %1010 = vmatmul.mubr.bf16.gmra.mrb[0].mxu0 %v702
        %v1011 = vpop.f32.mrb[0].mxu0
        %v1012 = vadd.f32 0.0, %v1011
        %v1013 = vpop.f32.mrb[0].mxu0
        %v1014 = vpop.f32.mrb[0].mxu0
        %v1015 = vadd.f32 0.0, %v1014
        %v1016 = vpop.f32.mrb[0].mxu0
        %1017 = vmatprep.mubr.bf16.mxu0 %v863
        %1018 = vmatmul.mubr.bf16.gmra.mrb[0].mxu0 %v704
        %v1019 = vpop.f32.mrb[0].mxu0
        %v1020 = vadd.f32 0.0, %v1019
        %v1021 = vpop.f32.mrb[0].mxu0
        %v1022 = vpop.f32.mrb[0].mxu0
        %v1023 = vadd.f32 0.0, %v1022
        %v1024 = vpop.f32.mrb[0].mxu0
        %1025 = vmatprep.mubr.bf16.mxu0 %v866
        %1026 = vmatmul.mubr.bf16.gmra.mrb[0].mxu0 %v706
        %v1027 = vpop.f32.mrb[0].mxu0
        %v1028 = vadd.f32 0.0, %v1027
        %v1029 = vpop.f32.mrb[0].mxu0
        %v1030 = vpop.f32.mrb[0].mxu0
        %v1031 = vadd.f32 0.0, %v1030
        %v1032 = vpop.f32.mrb[0].mxu0
        %1033 = vmatprep.mubr.bf16.mxu0 %v869
        %1034 = vmatmul.mubr.bf16.gmra.mrb[0].mxu0 %v708
        %v1035 = vpop.f32.mrb[0].mxu0
        %v1036 = vadd.f32 0.0, %v1035
        %v1037 = vpop.f32.mrb[0].mxu0
        %v1038 = vpop.f32.mrb[0].mxu0
        %v1039 = vadd.f32 0.0, %v1038
        %v1040 = vpop.f32.mrb[0].mxu0
        %1041 = vmatprep.mubr.bf16.mxu0 %v872
        %1042 = vmatmul.mubr.bf16.gmra.mrb[0].mxu0 %v710
        %v1043 = vpop.f32.mrb[0].mxu0
        %v1044 = vadd.f32 0.0, %v1043
        %v1045 = vpop.f32.mrb[0].mxu0
        %v1046 = vpop.f32.mrb[0].mxu0
        %v1047 = vadd.f32 0.0, %v1046
        %v1048 = vpop.f32.mrb[0].mxu0
        %1049 = vmatprep.mubr.bf16.mxu0 %v875
        %1050 = vmatmul.mubr.bf16.gmra.mrb[0].mxu0 %v712
        %v1051 = vpop.f32.mrb[0].mxu0
        %v1052 = vadd.f32 0.0, %v1051
        %v1053 = vpop.f32.mrb[0].mxu0
        %v1054 = vpop.f32.mrb[0].mxu0
        %v1055 = vadd.f32 0.0, %v1054
        %v1056 = vpop.f32.mrb[0].mxu0
        %1057 = vmatprep.mubr.bf16.mxu0 %v878
        %1058 = vmatmul.mubr.bf16.gmra.mrb[0].mxu0 %v714
        %v1059 = vpop.f32.mrb[0].mxu0
        %v1060 = vadd.f32 0.0, %v1059
        %v1061 = vpop.f32.mrb[0].mxu0
        %v1062 = vpop.f32.mrb[0].mxu0
        %v1063 = vadd.f32 0.0, %v1062
        %v1064 = vpop.f32.mrb[0].mxu0
        %1065 = vmatprep.mubr.bf16.mxu0 %v881
        %1066 = vmatmul.mubr.bf16.gmra.mrb[0].mxu0 %v716
        %v1067 = vpop.f32.mrb[0].mxu0
        %v1068 = vadd.f32 0.0, %v1067
        %v1069 = vpop.f32.mrb[0].mxu0
        %v1070 = vpop.f32.mrb[0].mxu0
        %v1071 = vadd.f32 0.0, %v1070
        %v1072 = vpop.f32.mrb[0].mxu0
        %1073 = vmatprep.mubr.bf16.mxu0 %v884
        %1074 = vmatmul.mubr.bf16.gmra.mrb[0].mxu0 %v718
        %v1075 = vpop.f32.mrb[0].mxu0
        %v1076 = vadd.f32 0.0, %v1075
        %v1077 = vpop.f32.mrb[0].mxu0
        %v1078 = vpop.f32.mrb[0].mxu0
        %v1079 = vadd.f32 0.0, %v1078
        %v1080 = vpop.f32.mrb[0].mxu0
        %1081 = vmatprep.mubr.bf16.mxu0 %v887
        %1082 = vmatmul.mubr.bf16.gmra.mrb[0].mxu0 %v720
        %v1083 = vpop.f32.mrb[0].mxu0
        %v1084 = vadd.f32 0.0, %v1083
        %v1085 = vpop.f32.mrb[0].mxu0
        %v1086 = vpop.f32.mrb[0].mxu0
        %v1087 = vadd.f32 0.0, %v1086
        %v1088 = vpop.f32.mrb[0].mxu0
        %1089 = vmatprep.mubr.bf16.mxu0 %v890
        %1090 = vmatmul.mubr.bf16.gmra.mrb[0].mxu0 %v722
        %v1091 = vpop.f32.mrb[0].mxu0
        %v1092 = vadd.f32 0.0, %v1091
        %v1093 = vpop.f32.mrb[0].mxu0
        %v1094 = vpop.f32.mrb[0].mxu0
        %v1095 = vadd.f32 0.0, %v1094
        %v1096 = vpop.f32.mrb[0].mxu0
        %1097 = vmatprep.mubr.bf16.mxu0 %v893
        %1098 = vmatmul.mubr.bf16.gmra.mrb[0].mxu0 %v724
        %v1099 = vpop.f32.mrb[0].mxu0
        %v1100 = vadd.f32 0.0, %v1099
        %v1101 = vpop.f32.mrb[0].mxu0
        %v1102 = vpop.f32.mrb[0].mxu0
        %v1103 = vadd.f32 0.0, %v1102
        %v1104 = vpop.f32.mrb[0].mxu0
        %1105 = vmatprep.mubr.bf16.mxu0 %v896
        %1106 = vmatmul.mubr.bf16.gmra.mrb[0].mxu0 %v726
        %v1107 = vpop.f32.mrb[0].mxu0
        %v1108 = vadd.f32 0.0, %v1107
        %v1109 = vpop.f32.mrb[0].mxu0
        %v1110 = vpop.f32.mrb[0].mxu0
        %v1111 = vadd.f32 0.0, %v1110
        %v1112 = vpop.f32.mrb[0].mxu0
        %1113 = vmatprep.mubr.bf16.mxu0 %v899
        %1114 = vmatmul.mubr.bf16.gmra.mrb[0].mxu0 %v728
        %v1115 = vpop.f32.mrb[0].mxu0
        %v1116 = vadd.f32 0.0, %v1115
        %v1117 = vpop.f32.mrb[0].mxu0
        %v1118 = vpop.f32.mrb[0].mxu0
        %v1119 = vadd.f32 0.0, %v1118
        %v1120 = vpop.f32.mrb[0].mxu0
        %1121 = vmatprep.mubr.bf16.mxu0 %v902
        %1122 = vmatmul.mubr.bf16.gmra.mrb[0].mxu0 %v730
        %v1123 = vpop.f32.mrb[0].mxu0
        %v1124 = vadd.f32 0.0, %v1123
        %v1125 = vpop.f32.mrb[0].mxu0
        %v1126 = vpop.f32.mrb[0].mxu0
        %v1127 = vadd.f32 0.0, %v1126
        %v1128 = vpop.f32.mrb[0].mxu0
        %1129 = vmatprep.mubr.bf16.mxu0 %v905
        %1130 = vmatmul.mubr.bf16.gmra.mrb[0].mxu0 %v732
        %v1131 = vpop.f32.mrb[0].mxu0
        %v1132 = vadd.f32 0.0, %v1131
        %v1133 = vpop.f32.mrb[0].mxu0
        %v1134 = vpop.f32.mrb[0].mxu0
        %v1135 = vadd.f32 0.0, %v1134
        %v1136 = vpop.f32.mrb[0].mxu0
        %1137 = vmatprep.mubr.bf16.mxu0 %v908
        %1138 = vmatmul.mubr.bf16.gmra.mrb[0].mxu0 %v734
        %v1139 = vpop.f32.mrb[0].mxu0
        %v1140 = vadd.f32 0.0, %v1139
        %v1141 = vpop.f32.mrb[0].mxu0
        %v1142 = vpop.f32.mrb[0].mxu0
        %v1143 = vadd.f32 0.0, %v1142
        %v1144 = vpop.f32.mrb[0].mxu0
        %1145 = vmatprep.mubr.bf16.mxu0 %v911
        %1146 = vmatmul.mubr.bf16.gmra.mrb[0].mxu0 %v736
        %v1147 = vpop.f32.mrb[0].mxu0
        %v1148 = vadd.f32 0.0, %v1147
        %v1149 = vpop.f32.mrb[0].mxu0
        %v1150 = vpop.f32.mrb[0].mxu0
        %v1151 = vadd.f32 0.0, %v1150
        %v1152 = vpop.f32.mrb[0].mxu0
        %1153 = vmatprep.mubr.bf16.mxu0 %v914
        %1154 = vmatmul.mubr.bf16.gmra.mrb[0].mxu0 %v738
        %v1155 = vpop.f32.mrb[0].mxu0
        %v1156 = vadd.f32 0.0, %v1155
        %v1157 = vpop.f32.mrb[0].mxu0
        %v1158 = vpop.f32.mrb[0].mxu0
        %v1159 = vadd.f32 0.0, %v1158
        %v1160 = vpop.f32.mrb[0].mxu0
        %1161 = vmatprep.mubr.bf16.mxu0 %v917
        %1162 = vmatmul.mubr.bf16.gmra.mrb[0].mxu0 %v740
        %v1163 = vpop.f32.mrb[0].mxu0
        %v1164 = vadd.f32 0.0, %v1163
        %v1165 = vpop.f32.mrb[0].mxu0
        %v1166 = vpop.f32.mrb[0].mxu0
        %v1167 = vadd.f32 0.0, %v1166
        %v1168 = vpop.f32.mrb[0].mxu0
        %1169 = vmatprep.mubr.bf16.mxu0 %v920
        %1170 = vmatmul.mubr.bf16.gmra.mrb[0].mxu0 %v742
        %v1171 = vpop.f32.mrb[0].mxu0
        %v1172 = vadd.f32 0.0, %v1171
        %v1173 = vpop.f32.mrb[0].mxu0
        %v1174 = vpop.f32.mrb[0].mxu0
        %v1175 = vadd.f32 0.0, %v1174
        %v1176 = vpop.f32.mrb[0].mxu0
        %1177 = vmatprep.mubr.bf16.mxu0 %v923
        %1178 = vmatmul.mubr.bf16.gmra.mrb[0].mxu0 %v744
        %v1179 = vpop.f32.mrb[0].mxu0
        %v1180 = vadd.f32 0.0, %v1179
        %v1181 = vpop.f32.mrb[0].mxu0
        %v1182 = vpop.f32.mrb[0].mxu0
        %v1183 = vadd.f32 0.0, %v1182
        %v1184 = vpop.f32.mrb[0].mxu0
        %1185 = vmatprep.mubr.bf16.mxu0 %v926
        %1186 = vmatmul.mubr.bf16.gmra.mrb[0].mxu0 %v746
        %v1187 = vpop.f32.mrb[0].mxu0
        %v1188 = vadd.f32 0.0, %v1187
        %v1189 = vpop.f32.mrb[0].mxu0
        %v1190 = vpop.f32.mrb[0].mxu0
        %v1191 = vadd.f32 0.0, %v1190
        %v1192 = vpop.f32.mrb[0].mxu0
        %1193 = vmatprep.mubr.bf16.mxu0 %v929
        %1194 = vmatmul.mubr.bf16.gmra.mrb[0].mxu0 %v748
        %v1195 = vpop.f32.mrb[0].mxu0
        %v1196 = vadd.f32 0.0, %v1195
        %v1197 = vpop.f32.mrb[0].mxu0
        %v1198 = vpop.f32.mrb[0].mxu0
        %v1199 = vadd.f32 0.0, %v1198
        %v1200 = vpop.f32.mrb[0].mxu0
        %1201 = vmatprep.mubr.bf16.mxu0 %v932
        %1202 = vmatmul.mubr.bf16.gmra.mrb[0].mxu0 %v750
        %v1203 = vpop.f32.mrb[0].mxu0
        %v1204 = vadd.f32 0.0, %v1203
        %v1205 = vpop.f32.mrb[0].mxu0
        %v1206 = vpop.f32.mrb[0].mxu0
        %v1207 = vadd.f32 0.0, %v1206
        %v1208 = vpop.f32.mrb[0].mxu0
        %1209 = vmatprep.mubr.bf16.mxu0 %v935
        %1210 = vmatmul.mubr.bf16.gmra.mrb[0].mxu0 %v752
        %v1211 = vpop.f32.mrb[0].mxu0
        %v1212 = vadd.f32 0.0, %v1211
        %v1213 = vpop.f32.mrb[0].mxu0
        %v1214 = vpop.f32.mrb[0].mxu0
        %v1215 = vadd.f32 0.0, %v1214
        %v1216 = vpop.f32.mrb[0].mxu0
        %1217 = vmatprep.mubr.bf16.mxu0 %v938
        %1218 = vmatmul.mubr.bf16.gmra.mrb[0].mxu0 %v754
        %v1219 = vpop.f32.mrb[0].mxu0
        %v1220 = vadd.f32 0.0, %v1219
        %v1221 = vpop.f32.mrb[0].mxu0
        %v1222 = vpop.f32.mrb[0].mxu0
        %v1223 = vadd.f32 0.0, %v1222
        %v1224 = vpop.f32.mrb[0].mxu0
        %1225 = vmatprep.mubr.bf16.mxu0 %v941
        %1226 = vmatmul.mubr.bf16.gmra.mrb[0].mxu0 %v756
        %v1227 = vpop.f32.mrb[0].mxu0
        %v1228 = vadd.f32 0.0, %v1227
        %v1229 = vpop.f32.mrb[0].mxu0
        %v1230 = vpop.f32.mrb[0].mxu0
        %v1231 = vadd.f32 0.0, %v1230
        %v1232 = vpop.f32.mrb[0].mxu0
        %1233 = vmatprep.mubr.bf16.mxu0 %v944
        %1234 = vmatmul.mubr.bf16.gmra.mrb[0].mxu0 %v758
        %v1235 = vpop.f32.mrb[0].mxu0
        %v1236 = vadd.f32 0.0, %v1235
        %v1237 = vpop.f32.mrb[0].mxu0
        %v1238 = vpop.f32.mrb[0].mxu0
        %v1239 = vadd.f32 0.0, %v1238
        %v1240 = vpop.f32.mrb[0].mxu0
        %1241 = vdwg.mxu0
        %v1242 = vadd.f32 %v357, %v988
        %v1243 = vadd.f32 %v358, %v991
        %v1244 = vadd.f32 %v359, %v996
        %v1245 = vadd.f32 %v360, %v999
        %v1246 = vadd.f32 %v361, %v1004
        %v1247 = vadd.f32 %v362, %v1007
        %v1248 = vadd.f32 %v363, %v1012
        %v1249 = vadd.f32 %v364, %v1015
        %v1250 = vadd.f32 %v365, %v1020
        %v1251 = vadd.f32 %v366, %v1023
        %v1252 = vadd.f32 %v367, %v1028
        %v1253 = vadd.f32 %v368, %v1031
        %v1254 = vadd.f32 %v369, %v1036
        %v1255 = vadd.f32 %v370, %v1039
        %v1256 = vadd.f32 %v371, %v1044
        %v1257 = vadd.f32 %v372, %v1047
        %v1258 = vadd.f32 %v373, %v1052
        %v1259 = vadd.f32 %v374, %v1055
        %v1260 = vadd.f32 %v375, %v1060
        %v1261 = vadd.f32 %v376, %v1063
        %v1262 = vadd.f32 %v377, %v1068
        %v1263 = vadd.f32 %v378, %v1071
        %v1264 = vadd.f32 %v379, %v1076
        %v1265 = vadd.f32 %v380, %v1079
        %v1266 = vadd.f32 %v381, %v1084
        %v1267 = vadd.f32 %v382, %v1087
        %v1268 = vadd.f32 %v383, %v1092
        %v1269 = vadd.f32 %v384, %v1095
        %v1270 = vadd.f32 %v385, %v1100
        %v1271 = vadd.f32 %v386, %v1103
        %v1272 = vadd.f32 %v387, %v1108
        %v1273 = vadd.f32 %v388, %v1111
        %v1274 = vadd.f32 %v389, %v1116
        %v1275 = vadd.f32 %v390, %v1119
        %v1276 = vadd.f32 %v391, %v1124
        %v1277 = vadd.f32 %v392, %v1127
        %v1278 = vadd.f32 %v393, %v1132
        %v1279 = vadd.f32 %v394, %v1135
        %v1280 = vadd.f32 %v395, %v1140
        %v1281 = vadd.f32 %v396, %v1143
        %v1282 = vadd.f32 %v397, %v1148
        %v1283 = vadd.f32 %v398, %v1151
        %v1284 = vadd.f32 %v399, %v1156
        %v1285 = vadd.f32 %v400, %v1159
        %v1286 = vadd.f32 %v401, %v1164
        %v1287 = vadd.f32 %v402, %v1167
        %v1288 = vadd.f32 %v403, %v1172
        %v1289 = vadd.f32 %v404, %v1175
        %v1290 = vadd.f32 %v405, %v1180
        %v1291 = vadd.f32 %v406, %v1183
        %v1292 = vadd.f32 %v407, %v1188
        %v1293 = vadd.f32 %v408, %v1191
        %v1294 = vadd.f32 %v409, %v1196
        %v1295 = vadd.f32 %v410, %v1199
        %v1296 = vadd.f32 %v411, %v1204
        %v1297 = vadd.f32 %v412, %v1207
        %v1298 = vadd.f32 %v413, %v1212
        %v1299 = vadd.f32 %v414, %v1215
        %v1300 = vadd.f32 %v415, %v1220
        %v1301 = vadd.f32 %v416, %v1223
        %v1302 = vadd.f32 %v417, %v1228
        %v1303 = vadd.f32 %v418, %v1231
        %v1304 = vadd.f32 %v419, %v1236
        %v1305 = vadd.f32 %v420, %v1239
        %vm1306 = vcmask 523264
        %1307 = vst.msk [vmem:[#allocation2] sm:$0xff] %vm1306, %v1242
        %1308 = vst.msk [vmem:[#allocation2 + $0x8] sm:$0xff] %vm1306, %v1243
        %1309 = vst.msk [vmem:[#allocation2 + $0x10] sm:$0xff] %vm1306, %v1244
        %1310 = vst.msk [vmem:[#allocation2 + $0x18] sm:$0xff] %vm1306, %v1245
        %1311 = vst.msk [vmem:[#allocation2 + $0x20] sm:$0xff] %vm1306, %v1246
        %1312 = vst.msk [vmem:[#allocation2 + $0x28] sm:$0xff] %vm1306, %v1247
        %1313 = vst.msk [vmem:[#allocation2 + $0x30] sm:$0xff] %vm1306, %v1248
        %1314 = vst.msk [vmem:[#allocation2 + $0x38] sm:$0xff] %vm1306, %v1249
        %1315 = vst.msk [vmem:[#allocation2 + $0x40] sm:$0xff] %vm1306, %v1250
        %1316 = vst.msk [vmem:[#allocation2 + $0x48] sm:$0xff] %vm1306, %v1251
        %1317 = vst.msk [vmem:[#allocation2 + $0x50] sm:$0xff] %vm1306, %v1252
        %1318 = vst.msk [vmem:[#allocation2 + $0x58] sm:$0xff] %vm1306, %v1253
        %1319 = vst.msk [vmem:[#allocation2 + $0x60] sm:$0xff] %vm1306, %v1254
        %1320 = vst.msk [vmem:[#allocation2 + $0x68] sm:$0xff] %vm1306, %v1255
        %1321 = vst.msk [vmem:[#allocation2 + $0x70] sm:$0xff] %vm1306, %v1256
        %1322 = vst.msk [vmem:[#allocation2 + $0x78] sm:$0xff] %vm1306, %v1257
        %1323 = vst.msk [vmem:[#allocation2 + $0x80] sm:$0xff] %vm1306, %v1258
        %1324 = vst.msk [vmem:[#allocation2 + $0x88] sm:$0xff] %vm1306, %v1259
        %1325 = vst.msk [vmem:[#allocation2 + $0x90] sm:$0xff] %vm1306, %v1260
        %1326 = vst.msk [vmem:[#allocation2 + $0x98] sm:$0xff] %vm1306, %v1261
        %1327 = vst.msk [vmem:[#allocation2 + $0xa0] sm:$0xff] %vm1306, %v1262
        %1328 = vst.msk [vmem:[#allocation2 + $0xa8] sm:$0xff] %vm1306, %v1263
        %1329 = vst.msk [vmem:[#allocation2 + $0xb0] sm:$0xff] %vm1306, %v1264
        %1330 = vst.msk [vmem:[#allocation2 + $0xb8] sm:$0xff] %vm1306, %v1265
        %1331 = vst.msk [vmem:[#allocation2 + $0xc0] sm:$0xff] %vm1306, %v1266
        %1332 = vst.msk [vmem:[#allocation2 + $0xc8] sm:$0xff] %vm1306, %v1267
        %1333 = vst.msk [vmem:[#allocation2 + $0xd0] sm:$0xff] %vm1306, %v1268
        %1334 = vst.msk [vmem:[#allocation2 + $0xd8] sm:$0xff] %vm1306, %v1269
        %1335 = vst.msk [vmem:[#allocation2 + $0xe0] sm:$0xff] %vm1306, %v1270
        %1336 = vst.msk [vmem:[#allocation2 + $0xe8] sm:$0xff] %vm1306, %v1271
        %1337 = vst.msk [vmem:[#allocation2 + $0xf0] sm:$0xff] %vm1306, %v1272
        %1338 = vst.msk [vmem:[#allocation2 + $0xf8] sm:$0xff] %vm1306, %v1273
        %1339 = vst.msk [vmem:[#allocation2 + $0x100] sm:$0xff] %vm1306, %v1274
        %1340 = vst.msk [vmem:[#allocation2 + $0x108] sm:$0xff] %vm1306, %v1275
        %1341 = vst.msk [vmem:[#allocation2 + $0x110] sm:$0xff] %vm1306, %v1276
        %1342 = vst.msk [vmem:[#allocation2 + $0x118] sm:$0xff] %vm1306, %v1277
        %1343 = vst.msk [vmem:[#allocation2 + $0x120] sm:$0xff] %vm1306, %v1278
        %1344 = vst.msk [vmem:[#allocation2 + $0x128] sm:$0xff] %vm1306, %v1279
        %1345 = vst.msk [vmem:[#allocation2 + $0x130] sm:$0xff] %vm1306, %v1280
        %1346 = vst.msk [vmem:[#allocation2 + $0x138] sm:$0xff] %vm1306, %v1281
        %1347 = vst.msk [vmem:[#allocation2 + $0x140] sm:$0xff] %vm1306, %v1282
        %1348 = vst.msk [vmem:[#allocation2 + $0x148] sm:$0xff] %vm1306, %v1283
        %1349 = vst.msk [vmem:[#allocation2 + $0x150] sm:$0xff] %vm1306, %v1284
        %1350 = vst.msk [vmem:[#allocation2 + $0x158] sm:$0xff] %vm1306, %v1285
        %1351 = vst.msk [vmem:[#allocation2 + $0x160] sm:$0xff] %vm1306, %v1286
        %1352 = vst.msk [vmem:[#allocation2 + $0x168] sm:$0xff] %vm1306, %v1287
        %1353 = vst.msk [vmem:[#allocation2 + $0x170] sm:$0xff] %vm1306, %v1288
        %1354 = vst.msk [vmem:[#allocation2 + $0x178] sm:$0xff] %vm1306, %v1289
        %1355 = vst.msk [vmem:[#allocation2 + $0x180] sm:$0xff] %vm1306, %v1290
        %1356 = vst.msk [vmem:[#allocation2 + $0x188] sm:$0xff] %vm1306, %v1291
        %1357 = vst.msk [vmem:[#allocation2 + $0x190] sm:$0xff] %vm1306, %v1292
        %1358 = vst.msk [vmem:[#allocation2 + $0x198] sm:$0xff] %vm1306, %v1293
        %1359 = vst.msk [vmem:[#allocation2 + $0x1a0] sm:$0xff] %vm1306, %v1294
        %1360 = vst.msk [vmem:[#allocation2 + $0x1a8] sm:$0xff] %vm1306, %v1295
        %1361 = vst.msk [vmem:[#allocation2 + $0x1b0] sm:$0xff] %vm1306, %v1296
        %1362 = vst.msk [vmem:[#allocation2 + $0x1b8] sm:$0xff] %vm1306, %v1297
        %1363 = vst.msk [vmem:[#allocation2 + $0x1c0] sm:$0xff] %vm1306, %v1298
        %1364 = vst.msk [vmem:[#allocation2 + $0x1c8] sm:$0xff] %vm1306, %v1299
        %1365 = vst.msk [vmem:[#allocation2 + $0x1d0] sm:$0xff] %vm1306, %v1300
        %1366 = vst.msk [vmem:[#allocation2 + $0x1d8] sm:$0xff] %vm1306, %v1301
        %1367 = vst.msk [vmem:[#allocation2 + $0x1e0] sm:$0xff] %vm1306, %v1302
        %1368 = vst.msk [vmem:[#allocation2 + $0x1e8] sm:$0xff] %vm1306, %v1303
        %1369 = vst.msk [vmem:[#allocation2 + $0x1f0] sm:$0xff] %vm1306, %v1304
        %1370 = vst.msk [vmem:[#allocation2 + $0x1f8] sm:$0xff] %vm1306, %v1305
        %p1371 = scmp.eq.s32.totalorder %s24, 0
        %p1372 = pnand %p1371, %p288
        %p1373 = pneg %p1372
        // Predicated region
        $region33: #{tpu_custom_call.1} parent=27 // pred_check
          _
        $region34: #{tpu_custom_call.1} parent=27 // pred_check_branch
          %1375 = sbr.rel (%p1372) target = $region36
        $region35: #{tpu_custom_call.1} parent=27 // pred_region
          %vm1376 = vcmask 516096
          %1377 = vst.msk [vmem:[#allocation3] sm:$0x1] %vm1376, 0.0
          %1378 = vst.msk [vmem:[#allocation5] sm:$0x1] %vm1376, 0.0
        $region36: #{tpu_custom_call.1} parent=27 // pred_fallthru
          _
        // Predicated region
        $region37: #{tpu_custom_call.1} parent=27 // pred_check
          %p1379 = pneg %p288
        $region38: #{tpu_custom_call.1} parent=27 // pred_check_branch
          %1381 = sbr.rel (%p1379) target = $region40
        $region39: #{tpu_custom_call.1} parent=27 // pred_region
          %v1382 = vld [vmem:[#allocation2] sm:$0xff]
          %v1383 = vld [vmem:[#allocation2 + $0x8] sm:$0xff]
          %v1384 = vld [vmem:[#allocation2 + $0x10] sm:$0xff]
          %v1385 = vld [vmem:[#allocation2 + $0x18] sm:$0xff]
          %v1386 = vld [vmem:[#allocation2 + $0x20] sm:$0xff]
          %v1387 = vld [vmem:[#allocation2 + $0x28] sm:$0xff]
          %v1388 = vld [vmem:[#allocation2 + $0x30] sm:$0xff]
          %v1389 = vld [vmem:[#allocation2 + $0x38] sm:$0xff]
          %v1390 = vld [vmem:[#allocation2 + $0x40] sm:$0xff]
          %v1391 = vld [vmem:[#allocation2 + $0x48] sm:$0xff]
          %v1392 = vld [vmem:[#allocation2 + $0x50] sm:$0xff]
          %v1393 = vld [vmem:[#allocation2 + $0x58] sm:$0xff]
          %v1394 = vld [vmem:[#allocation2 + $0x60] sm:$0xff]
          %v1395 = vld [vmem:[#allocation2 + $0x68] sm:$0xff]
          %v1396 = vld [vmem:[#allocation2 + $0x70] sm:$0xff]
          %v1397 = vld [vmem:[#allocation2 + $0x78] sm:$0xff]
          %v1398 = vld [vmem:[#allocation2 + $0x80] sm:$0xff]
          %v1399 = vld [vmem:[#allocation2 + $0x88] sm:$0xff]
          %v1400 = vld [vmem:[#allocation2 + $0x90] sm:$0xff]
          %v1401 = vld [vmem:[#allocation2 + $0x98] sm:$0xff]
          %v1402 = vld [vmem:[#allocation2 + $0xa0] sm:$0xff]
          %v1403 = vld [vmem:[#allocation2 + $0xa8] sm:$0xff]
          %v1404 = vld [vmem:[#allocation2 + $0xb0] sm:$0xff]
          %v1405 = vld [vmem:[#allocation2 + $0xb8] sm:$0xff]
          %v1406 = vld [vmem:[#allocation2 + $0xc0] sm:$0xff]
          %v1407 = vld [vmem:[#allocation2 + $0xc8] sm:$0xff]
          %v1408 = vld [vmem:[#allocation2 + $0xd0] sm:$0xff]
          %v1409 = vld [vmem:[#allocation2 + $0xd8] sm:$0xff]
          %v1410 = vld [vmem:[#allocation2 + $0xe0] sm:$0xff]
          %v1411 = vld [vmem:[#allocation2 + $0xe8] sm:$0xff]
          %v1412 = vld [vmem:[#allocation2 + $0xf0] sm:$0xff]
          %v1413 = vld [vmem:[#allocation2 + $0xf8] sm:$0xff]
          %v1414 = vld [vmem:[#allocation2 + $0x100] sm:$0xff]
          %v1415 = vld [vmem:[#allocation2 + $0x108] sm:$0xff]
          %v1416 = vld [vmem:[#allocation2 + $0x110] sm:$0xff]
          %v1417 = vld [vmem:[#allocation2 + $0x118] sm:$0xff]
          %v1418 = vld [vmem:[#allocation2 + $0x120] sm:$0xff]
          %v1419 = vld [vmem:[#allocation2 + $0x128] sm:$0xff]
          %v1420 = vld [vmem:[#allocation2 + $0x130] sm:$0xff]
          %v1421 = vld [vmem:[#allocation2 + $0x138] sm:$0xff]
          %v1422 = vld [vmem:[#allocation2 + $0x140] sm:$0xff]
          %v1423 = vld [vmem:[#allocation2 + $0x148] sm:$0xff]
          %v1424 = vld [vmem:[#allocation2 + $0x150] sm:$0xff]
          %v1425 = vld [vmem:[#allocation2 + $0x158] sm:$0xff]
          %v1426 = vld [vmem:[#allocation2 + $0x160] sm:$0xff]
          %v1427 = vld [vmem:[#allocation2 + $0x168] sm:$0xff]
          %v1428 = vld [vmem:[#allocation2 + $0x170] sm:$0xff]
          %v1429 = vld [vmem:[#allocation2 + $0x178] sm:$0xff]
          %v1430 = vld [vmem:[#allocation2 + $0x180] sm:$0xff]
          %v1431 = vld [vmem:[#allocation2 + $0x188] sm:$0xff]
          %v1432 = vld [vmem:[#allocation2 + $0x190] sm:$0xff]
          %v1433 = vld [vmem:[#allocation2 + $0x198] sm:$0xff]
          %v1434 = vld [vmem:[#allocation2 + $0x1a0] sm:$0xff]
          %v1435 = vld [vmem:[#allocation2 + $0x1a8] sm:$0xff]
          %v1436 = vld [vmem:[#allocation2 + $0x1b0] sm:$0xff]
          %v1437 = vld [vmem:[#allocation2 + $0x1b8] sm:$0xff]
          %v1438 = vld [vmem:[#allocation2 + $0x1c0] sm:$0xff]
          %v1439 = vld [vmem:[#allocation2 + $0x1c8] sm:$0xff]
          %v1440 = vld [vmem:[#allocation2 + $0x1d0] sm:$0xff]
          %v1441 = vld [vmem:[#allocation2 + $0x1d8] sm:$0xff]
          %v1442 = vld [vmem:[#allocation2 + $0x1e0] sm:$0xff]
          %v1443 = vld [vmem:[#allocation2 + $0x1e8] sm:$0xff]
          %v1444 = vld [vmem:[#allocation2 + $0x1f0] sm:$0xff]
          %v1445 = vld [vmem:[#allocation2 + $0x1f8] sm:$0xff]
          %v1446 = vpack.c.bf16 %v1383, %v1382
          %v1447 = vpack.c.bf16 %v1385, %v1384
          %v1448 = vpack.c.bf16 %v1387, %v1386
          %v1449 = vpack.c.bf16 %v1389, %v1388
          %v1450 = vpack.c.bf16 %v1391, %v1390
          %v1451 = vpack.c.bf16 %v1393, %v1392
          %v1452 = vpack.c.bf16 %v1395, %v1394
          %v1453 = vpack.c.bf16 %v1397, %v1396
          %v1454 = vpack.c.bf16 %v1399, %v1398
          %v1455 = vpack.c.bf16 %v1401, %v1400
          %v1456 = vpack.c.bf16 %v1403, %v1402
          %v1457 = vpack.c.bf16 %v1405, %v1404
          %v1458 = vpack.c.bf16 %v1407, %v1406
          %v1459 = vpack.c.bf16 %v1409, %v1408
          %v1460 = vpack.c.bf16 %v1411, %v1410
          %v1461 = vpack.c.bf16 %v1413, %v1412
          %v1462 = vpack.c.bf16 %v1415, %v1414
          %v1463 = vpack.c.bf16 %v1417, %v1416
          %v1464 = vpack.c.bf16 %v1419, %v1418
          %v1465 = vpack.c.bf16 %v1421, %v1420
          %v1466 = vpack.c.bf16 %v1423, %v1422
          %v1467 = vpack.c.bf16 %v1425, %v1424
          %v1468 = vpack.c.bf16 %v1427, %v1426
          %v1469 = vpack.c.bf16 %v1429, %v1428
          %v1470 = vpack.c.bf16 %v1431, %v1430
          %v1471 = vpack.c.bf16 %v1433, %v1432
          %v1472 = vpack.c.bf16 %v1435, %v1434
          %v1473 = vpack.c.bf16 %v1437, %v1436
          %v1474 = vpack.c.bf16 %v1439, %v1438
          %v1475 = vpack.c.bf16 %v1441, %v1440
          %v1476 = vpack.c.bf16 %v1443, %v1442
          %v1477 = vpack.c.bf16 %v1445, %v1444
          %v1510 = vunpack.c.l.b16 %v1446
          %v1511 = vunpack.c.h.b16 %v1446
          %v1512 = vunpack.c.l.b16 %v1447
          %v1513 = vunpack.c.h.b16 %v1447
          %v1514 = vunpack.c.l.b16 %v1448
          %v1515 = vunpack.c.h.b16 %v1448
          %v1516 = vunpack.c.l.b16 %v1449
          %v1517 = vunpack.c.h.b16 %v1449
          %v1518 = vunpack.c.l.b16 %v1450
          %v1519 = vunpack.c.h.b16 %v1450
          %v1520 = vunpack.c.l.b16 %v1451
          %v1521 = vunpack.c.h.b16 %v1451
          %v1522 = vunpack.c.l.b16 %v1452
          %v1523 = vunpack.c.h.b16 %v1452
          %v1524 = vunpack.c.l.b16 %v1453
          %v1525 = vunpack.c.h.b16 %v1453
          %v1526 = vunpack.c.l.b16 %v1454
          %v1527 = vunpack.c.h.b16 %v1454
          %v1528 = vunpack.c.l.b16 %v1455
          %v1529 = vunpack.c.h.b16 %v1455
          %v1530 = vunpack.c.l.b16 %v1456
          %v1531 = vunpack.c.h.b16 %v1456
          %v1532 = vunpack.c.l.b16 %v1457
          %v1533 = vunpack.c.h.b16 %v1457
          %v1534 = vunpack.c.l.b16 %v1458
          %v1535 = vunpack.c.h.b16 %v1458
          %v1536 = vunpack.c.l.b16 %v1459
          %v1537 = vunpack.c.h.b16 %v1459
          %v1538 = vunpack.c.l.b16 %v1460
          %v1539 = vunpack.c.h.b16 %v1460
          %v1540 = vunpack.c.l.b16 %v1461
          %v1541 = vunpack.c.h.b16 %v1461
          %v1542 = vunpack.c.l.b16 %v1462
          %v1543 = vunpack.c.h.b16 %v1462
          %v1544 = vunpack.c.l.b16 %v1463
          %v1545 = vunpack.c.h.b16 %v1463
          %v1546 = vunpack.c.l.b16 %v1464
          %v1547 = vunpack.c.h.b16 %v1464
          %v1548 = vunpack.c.l.b16 %v1465
          %v1549 = vunpack.c.h.b16 %v1465
          %v1550 = vunpack.c.l.b16 %v1466
          %v1551 = vunpack.c.h.b16 %v1466
          %v1552 = vunpack.c.l.b16 %v1467
          %v1553 = vunpack.c.h.b16 %v1467
          %v1554 = vunpack.c.l.b16 %v1468
          %v1555 = vunpack.c.h.b16 %v1468
          %v1556 = vunpack.c.l.b16 %v1469
          %v1557 = vunpack.c.h.b16 %v1469
          %v1558 = vunpack.c.l.b16 %v1470
          %v1559 = vunpack.c.h.b16 %v1470
          %v1560 = vunpack.c.l.b16 %v1471
          %v1561 = vunpack.c.h.b16 %v1471
          %v1562 = vunpack.c.l.b16 %v1472
          %v1563 = vunpack.c.h.b16 %v1472
          %v1564 = vunpack.c.l.b16 %v1473
          %v1565 = vunpack.c.h.b16 %v1473
          %v1566 = vunpack.c.l.b16 %v1474
          %v1567 = vunpack.c.h.b16 %v1474
          %v1568 = vunpack.c.l.b16 %v1475
          %v1569 = vunpack.c.h.b16 %v1475
          %v1570 = vunpack.c.l.b16 %v1476
          %v1571 = vunpack.c.h.b16 %v1476
          %v1572 = vunpack.c.l.b16 %v1477
          %v1573 = vunpack.c.h.b16 %v1477
          %v1574 = vpack.c.b16 %v1510, %v1510
          %v1575 = vpack.c.b16 %v1511, %v1511
          %v1576 = vpack.c.b16 %v1512, %v1512
          %v1577 = vpack.c.b16 %v1513, %v1513
          %v1578 = vpack.c.b16 %v1514, %v1514
          %v1579 = vpack.c.b16 %v1515, %v1515
          %v1580 = vpack.c.b16 %v1516, %v1516
          %v1581 = vpack.c.b16 %v1517, %v1517
          %v1582 = vpack.c.b16 %v1518, %v1518
          %v1583 = vpack.c.b16 %v1519, %v1519
          %v1584 = vpack.c.b16 %v1520, %v1520
          %v1585 = vpack.c.b16 %v1521, %v1521
          %v1586 = vpack.c.b16 %v1522, %v1522
          %v1587 = vpack.c.b16 %v1523, %v1523
          %v1588 = vpack.c.b16 %v1524, %v1524
          %v1589 = vpack.c.b16 %v1525, %v1525
          %v1590 = vpack.c.b16 %v1526, %v1526
          %v1591 = vpack.c.b16 %v1527, %v1527
          %v1592 = vpack.c.b16 %v1528, %v1528
          %v1593 = vpack.c.b16 %v1529, %v1529
          %v1594 = vpack.c.b16 %v1530, %v1530
          %v1595 = vpack.c.b16 %v1531, %v1531
          %v1596 = vpack.c.b16 %v1532, %v1532
          %v1597 = vpack.c.b16 %v1533, %v1533
          %v1598 = vpack.c.b16 %v1534, %v1534
          %v1599 = vpack.c.b16 %v1535, %v1535
          %v1600 = vpack.c.b16 %v1536, %v1536
          %v1601 = vpack.c.b16 %v1537, %v1537
          %v1602 = vpack.c.b16 %v1538, %v1538
          %v1603 = vpack.c.b16 %v1539, %v1539
          %v1604 = vpack.c.b16 %v1540, %v1540
          %v1605 = vpack.c.b16 %v1541, %v1541
          %v1606 = vpack.c.b16 %v1542, %v1542
          %v1607 = vpack.c.b16 %v1543, %v1543
          %v1608 = vpack.c.b16 %v1544, %v1544
          %v1609 = vpack.c.b16 %v1545, %v1545
          %v1610 = vpack.c.b16 %v1546, %v1546
          %v1611 = vpack.c.b16 %v1547, %v1547
          %v1612 = vpack.c.b16 %v1548, %v1548
          %v1613 = vpack.c.b16 %v1549, %v1549
          %v1614 = vpack.c.b16 %v1550, %v1550
          %v1615 = vpack.c.b16 %v1551, %v1551
          %v1616 = vpack.c.b16 %v1552, %v1552
          %v1617 = vpack.c.b16 %v1553, %v1553
          %v1618 = vpack.c.b16 %v1554, %v1554
          %v1619 = vpack.c.b16 %v1555, %v1555
          %v1620 = vpack.c.b16 %v1556, %v1556
          %v1621 = vpack.c.b16 %v1557, %v1557
          %v1622 = vpack.c.b16 %v1558, %v1558
          %v1623 = vpack.c.b16 %v1559, %v1559
          %v1624 = vpack.c.b16 %v1560, %v1560
          %v1625 = vpack.c.b16 %v1561, %v1561
          %v1626 = vpack.c.b16 %v1562, %v1562
          %v1627 = vpack.c.b16 %v1563, %v1563
          %v1628 = vpack.c.b16 %v1564, %v1564
          %v1629 = vpack.c.b16 %v1565, %v1565
          %v1630 = vpack.c.b16 %v1566, %v1566
          %v1631 = vpack.c.b16 %v1567, %v1567
          %v1632 = vpack.c.b16 %v1568, %v1568
          %v1633 = vpack.c.b16 %v1569, %v1569
          %v1634 = vpack.c.b16 %v1570, %v1570
          %v1635 = vpack.c.b16 %v1571, %v1571
          %v1636 = vpack.c.b16 %v1572, %v1572
          %v1637 = vpack.c.b16 %v1573, %v1573
          %vm1702 = vcmask 519168
          %1703 = vst.msk [vmem:[%s285] sm:$0xf] %vm1702, %v1574
          %1704 = vst.msk [vmem:[%s285 + $0x4] sm:$0xf] %vm1702, %v1575
          %1705 = vst.msk [vmem:[%s285 + $0x8] sm:$0xf] %vm1702, %v1576
          %1706 = vst.msk [vmem:[%s285 + $0xc] sm:$0xf] %vm1702, %v1577
          %1707 = vst.msk [vmem:[%s285 + $0x10] sm:$0xf] %vm1702, %v1578
          %1708 = vst.msk [vmem:[%s285 + $0x14] sm:$0xf] %vm1702, %v1579
          %1709 = vst.msk [vmem:[%s285 + $0x18] sm:$0xf] %vm1702, %v1580
          %1710 = vst.msk [vmem:[%s285 + $0x1c] sm:$0xf] %vm1702, %v1581
          %1711 = vst.msk [vmem:[%s285 + $0x20] sm:$0xf] %vm1702, %v1582
          %1712 = vst.msk [vmem:[%s285 + $0x24] sm:$0xf] %vm1702, %v1583
          %1713 = vst.msk [vmem:[%s285 + $0x28] sm:$0xf] %vm1702, %v1584
          %1714 = vst.msk [vmem:[%s285 + $0x2c] sm:$0xf] %vm1702, %v1585
          %1715 = vst.msk [vmem:[%s285 + $0x30] sm:$0xf] %vm1702, %v1586
          %1716 = vst.msk [vmem:[%s285 + $0x34] sm:$0xf] %vm1702, %v1587
          %1717 = vst.msk [vmem:[%s285 + $0x38] sm:$0xf] %vm1702, %v1588
          %1718 = vst.msk [vmem:[%s285 + $0x3c] sm:$0xf] %vm1702, %v1589
          %1719 = vst.msk [vmem:[%s285 + $0x40] sm:$0xf] %vm1702, %v1590
          %1720 = vst.msk [vmem:[%s285 + $0x44] sm:$0xf] %vm1702, %v1591
          %1721 = vst.msk [vmem:[%s285 + $0x48] sm:$0xf] %vm1702, %v1592
          %1722 = vst.msk [vmem:[%s285 + $0x4c] sm:$0xf] %vm1702, %v1593
          %1723 = vst.msk [vmem:[%s285 + $0x50] sm:$0xf] %vm1702, %v1594
          %1724 = vst.msk [vmem:[%s285 + $0x54] sm:$0xf] %vm1702, %v1595
          %1725 = vst.msk [vmem:[%s285 + $0x58] sm:$0xf] %vm1702, %v1596
          %1726 = vst.msk [vmem:[%s285 + $0x5c] sm:$0xf] %vm1702, %v1597
          %1727 = vst.msk [vmem:[%s285 + $0x60] sm:$0xf] %vm1702, %v1598
          %1728 = vst.msk [vmem:[%s285 + $0x64] sm:$0xf] %vm1702, %v1599
          %1729 = vst.msk [vmem:[%s285 + $0x68] sm:$0xf] %vm1702, %v1600
          %1730 = vst.msk [vmem:[%s285 + $0x6c] sm:$0xf] %vm1702, %v1601
          %1731 = vst.msk [vmem:[%s285 + $0x70] sm:$0xf] %vm1702, %v1602
          %1732 = vst.msk [vmem:[%s285 + $0x74] sm:$0xf] %vm1702, %v1603
          %1733 = vst.msk [vmem:[%s285 + $0x78] sm:$0xf] %vm1702, %v1604
          %1734 = vst.msk [vmem:[%s285 + $0x7c] sm:$0xf] %vm1702, %v1605
          %1735 = vst.msk [vmem:[%s285 + $0x80] sm:$0xf] %vm1702, %v1606
          %1736 = vst.msk [vmem:[%s285 + $0x84] sm:$0xf] %vm1702, %v1607
          %1737 = vst.msk [vmem:[%s285 + $0x88] sm:$0xf] %vm1702, %v1608
          %1738 = vst.msk [vmem:[%s285 + $0x8c] sm:$0xf] %vm1702, %v1609
          %1739 = vst.msk [vmem:[%s285 + $0x90] sm:$0xf] %vm1702, %v1610
          %1740 = vst.msk [vmem:[%s285 + $0x94] sm:$0xf] %vm1702, %v1611
          %1741 = vst.msk [vmem:[%s285 + $0x98] sm:$0xf] %vm1702, %v1612
          %1742 = vst.msk [vmem:[%s285 + $0x9c] sm:$0xf] %vm1702, %v1613
          %1743 = vst.msk [vmem:[%s285 + $0xa0] sm:$0xf] %vm1702, %v1614
          %1744 = vst.msk [vmem:[%s285 + $0xa4] sm:$0xf] %vm1702, %v1615
          %1745 = vst.msk [vmem:[%s285 + $0xa8] sm:$0xf] %vm1702, %v1616
          %1746 = vst.msk [vmem:[%s285 + $0xac] sm:$0xf] %vm1702, %v1617
          %1747 = vst.msk [vmem:[%s285 + $0xb0] sm:$0xf] %vm1702, %v1618
          %1748 = vst.msk [vmem:[%s285 + $0xb4] sm:$0xf] %vm1702, %v1619
          %1749 = vst.msk [vmem:[%s285 + $0xb8] sm:$0xf] %vm1702, %v1620
          %1750 = vst.msk [vmem:[%s285 + $0xbc] sm:$0xf] %vm1702, %v1621
          %1751 = vst.msk [vmem:[%s285 + $0xc0] sm:$0xf] %vm1702, %v1622
          %1752 = vst.msk [vmem:[%s285 + $0xc4] sm:$0xf] %vm1702, %v1623
          %1753 = vst.msk [vmem:[%s285 + $0xc8] sm:$0xf] %vm1702, %v1624
          %1754 = vst.msk [vmem:[%s285 + $0xcc] sm:$0xf] %vm1702, %v1625
          %1755 = vst.msk [vmem:[%s285 + $0xd0] sm:$0xf] %vm1702, %v1626
          %1756 = vst.msk [vmem:[%s285 + $0xd4] sm:$0xf] %vm1702, %v1627
          %1757 = vst.msk [vmem:[%s285 + $0xd8] sm:$0xf] %vm1702, %v1628
          %1758 = vst.msk [vmem:[%s285 + $0xdc] sm:$0xf] %vm1702, %v1629
          %1759 = vst.msk [vmem:[%s285 + $0xe0] sm:$0xf] %vm1702, %v1630
          %1760 = vst.msk [vmem:[%s285 + $0xe4] sm:$0xf] %vm1702, %v1631
          %1761 = vst.msk [vmem:[%s285 + $0xe8] sm:$0xf] %vm1702, %v1632
          %1762 = vst.msk [vmem:[%s285 + $0xec] sm:$0xf] %vm1702, %v1633
          %1763 = vst.msk [vmem:[%s285 + $0xf0] sm:$0xf] %vm1702, %v1634
          %1764 = vst.msk [vmem:[%s285 + $0xf4] sm:$0xf] %vm1702, %v1635
          %1765 = vst.msk [vmem:[%s285 + $0xf8] sm:$0xf] %vm1702, %v1636
          %1766 = vst.msk [vmem:[%s285 + $0xfc] sm:$0xf] %vm1702, %v1637
          %v1767 = vld [vmem:[#allocation3] sm:$0x1]
          %v1768 = vsel %vm1306, %v1382, 0.0
          %v1769 = vsel %vm1306, %v1383, 0.0
          %v1770 = vadd.f32 %v1768, %v1769
          %v1771 = vsel %vm1306, %v1384, 0.0
          %v1772 = vadd.f32 %v1770, %v1771
          %v1773 = vsel %vm1306, %v1385, 0.0
          %v1774 = vadd.f32 %v1772, %v1773
          %v1775 = vsel %vm1306, %v1386, 0.0
          %v1776 = vadd.f32 %v1774, %v1775
          %v1777 = vsel %vm1306, %v1387, 0.0
          %v1778 = vadd.f32 %v1776, %v1777
          %v1779 = vsel %vm1306, %v1388, 0.0
          %v1780 = vadd.f32 %v1778, %v1779
          %v1781 = vsel %vm1306, %v1389, 0.0
          %v1782 = vadd.f32 %v1780, %v1781
          %v1783 = vsel %vm1306, %v1390, 0.0
          %v1784 = vadd.f32 %v1782, %v1783
          %v1785 = vsel %vm1306, %v1391, 0.0
          %v1786 = vadd.f32 %v1784, %v1785
          %v1787 = vsel %vm1306, %v1392, 0.0
          %v1788 = vadd.f32 %v1786, %v1787
          %v1789 = vsel %vm1306, %v1393, 0.0
          %v1790 = vadd.f32 %v1788, %v1789
          %v1791 = vsel %vm1306, %v1394, 0.0
          %v1792 = vadd.f32 %v1790, %v1791
          %v1793 = vsel %vm1306, %v1395, 0.0
          %v1794 = vadd.f32 %v1792, %v1793
          %v1795 = vsel %vm1306, %v1396, 0.0
          %v1796 = vadd.f32 %v1794, %v1795
          %v1797 = vsel %vm1306, %v1397, 0.0
          %v1798 = vadd.f32 %v1796, %v1797
          %v1799 = vsel %vm1306, %v1398, 0.0
          %v1800 = vadd.f32 %v1798, %v1799
          %v1801 = vsel %vm1306, %v1399, 0.0
          %v1802 = vadd.f32 %v1800, %v1801
          %v1803 = vsel %vm1306, %v1400, 0.0
          %v1804 = vadd.f32 %v1802, %v1803
          %v1805 = vsel %vm1306, %v1401, 0.0
          %v1806 = vadd.f32 %v1804, %v1805
          %v1807 = vsel %vm1306, %v1402, 0.0
          %v1808 = vadd.f32 %v1806, %v1807
          %v1809 = vsel %vm1306, %v1403, 0.0
          %v1810 = vadd.f32 %v1808, %v1809
          %v1811 = vsel %vm1306, %v1404, 0.0
          %v1812 = vadd.f32 %v1810, %v1811
          %v1813 = vsel %vm1306, %v1405, 0.0
          %v1814 = vadd.f32 %v1812, %v1813
          %v1815 = vsel %vm1306, %v1406, 0.0
          %v1816 = vadd.f32 %v1814, %v1815
          %v1817 = vsel %vm1306, %v1407, 0.0
          %v1818 = vadd.f32 %v1816, %v1817
          %v1819 = vsel %vm1306, %v1408, 0.0
          %v1820 = vadd.f32 %v1818, %v1819
          %v1821 = vsel %vm1306, %v1409, 0.0
          %v1822 = vadd.f32 %v1820, %v1821
          %v1823 = vsel %vm1306, %v1410, 0.0
          %v1824 = vadd.f32 %v1822, %v1823
          %v1825 = vsel %vm1306, %v1411, 0.0
          %v1826 = vadd.f32 %v1824, %v1825
          %v1827 = vsel %vm1306, %v1412, 0.0
          %v1828 = vadd.f32 %v1826, %v1827
          %v1829 = vsel %vm1306, %v1413, 0.0
          %v1830 = vadd.f32 %v1828, %v1829
          %v1831 = vsel %vm1306, %v1414, 0.0
          %v1832 = vadd.f32 %v1830, %v1831
          %v1833 = vsel %vm1306, %v1415, 0.0
          %v1834 = vadd.f32 %v1832, %v1833
          %v1835 = vsel %vm1306, %v1416, 0.0
          %v1836 = vadd.f32 %v1834, %v1835
          %v1837 = vsel %vm1306, %v1417, 0.0
          %v1838 = vadd.f32 %v1836, %v1837
          %v1839 = vsel %vm1306, %v1418, 0.0
          %v1840 = vadd.f32 %v1838, %v1839
          %v1841 = vsel %vm1306, %v1419, 0.0
          %v1842 = vadd.f32 %v1840, %v1841
          %v1843 = vsel %vm1306, %v1420, 0.0
          %v1844 = vadd.f32 %v1842, %v1843
          %v1845 = vsel %vm1306, %v1421, 0.0
          %v1846 = vadd.f32 %v1844, %v1845
          %v1847 = vsel %vm1306, %v1422, 0.0
          %v1848 = vadd.f32 %v1846, %v1847
          %v1849 = vsel %vm1306, %v1423, 0.0
          %v1850 = vadd.f32 %v1848, %v1849
          %v1851 = vsel %vm1306, %v1424, 0.0
          %v1852 = vadd.f32 %v1850, %v1851
          %v1853 = vsel %vm1306, %v1425, 0.0
          %v1854 = vadd.f32 %v1852, %v1853
          %v1855 = vsel %vm1306, %v1426, 0.0
          %v1856 = vadd.f32 %v1854, %v1855
          %v1857 = vsel %vm1306, %v1427, 0.0
          %v1858 = vadd.f32 %v1856, %v1857
          %v1859 = vsel %vm1306, %v1428, 0.0
          %v1860 = vadd.f32 %v1858, %v1859
          %v1861 = vsel %vm1306, %v1429, 0.0
          %v1862 = vadd.f32 %v1860, %v1861
          %v1863 = vsel %vm1306, %v1430, 0.0
          %v1864 = vadd.f32 %v1862, %v1863
          %v1865 = vsel %vm1306, %v1431, 0.0
          %v1866 = vadd.f32 %v1864, %v1865
          %v1867 = vsel %vm1306, %v1432, 0.0
          %v1868 = vadd.f32 %v1866, %v1867
          %v1869 = vsel %vm1306, %v1433, 0.0
          %v1870 = vadd.f32 %v1868, %v1869
          %v1871 = vsel %vm1306, %v1434, 0.0
          %v1872 = vadd.f32 %v1870, %v1871
          %v1873 = vsel %vm1306, %v1435, 0.0
          %v1874 = vadd.f32 %v1872, %v1873
          %v1875 = vsel %vm1306, %v1436, 0.0
          %v1876 = vadd.f32 %v1874, %v1875
          %v1877 = vsel %vm1306, %v1437, 0.0
          %v1878 = vadd.f32 %v1876, %v1877
          %v1879 = vsel %vm1306, %v1438, 0.0
          %v1880 = vadd.f32 %v1878, %v1879
          %v1881 = vsel %vm1306, %v1439, 0.0
          %v1882 = vadd.f32 %v1880, %v1881
          %v1883 = vsel %vm1306, %v1440, 0.0
          %v1884 = vadd.f32 %v1882, %v1883
          %v1885 = vsel %vm1306, %v1441, 0.0
          %v1886 = vadd.f32 %v1884, %v1885
          %v1887 = vsel %vm1306, %v1442, 0.0
          %v1888 = vadd.f32 %v1886, %v1887
          %v1889 = vsel %vm1306, %v1443, 0.0
          %v1890 = vadd.f32 %v1888, %v1889
          %v1891 = vsel %vm1306, %v1444, 0.0
          %v1892 = vadd.f32 %v1890, %v1891
          %v1893 = vsel %vm1306, %v1445, 0.0
          %v1894 = vadd.f32 %v1892, %v1893
          %v1895 = vrot.slane %v1894, 4
          %v1896 = vadd.f32 %v1894, %v1895
          %v1897 = vrot.slane %v1896, 2
          %v1898 = vadd.f32 %v1896, %v1897
          %v1899 = vrot.slane %v1898, 1
          %v1900 = vadd.f32 %v1898, %v1899
          %v1901 = vadd.f32 %v1767, %v1900
          %vm1902 = vcmask 516096
          %1903 = vst.msk [vmem:[#allocation3] sm:$0x1] %vm1902, %v1901
          %v1904 = vld [vmem:[#allocation5] sm:$0x1]
          %v1905 = vmul.f32 %v1382, %v1382
          %v1906 = vmul.f32 %v1383, %v1383
          %v1907 = vmul.f32 %v1384, %v1384
          %v1908 = vmul.f32 %v1385, %v1385
          %v1909 = vmul.f32 %v1386, %v1386
          %v1910 = vmul.f32 %v1387, %v1387
          %v1911 = vmul.f32 %v1388, %v1388
          %v1912 = vmul.f32 %v1389, %v1389
          %v1913 = vmul.f32 %v1390, %v1390
          %v1914 = vmul.f32 %v1391, %v1391
          %v1915 = vmul.f32 %v1392, %v1392
          %v1916 = vmul.f32 %v1393, %v1393
          %v1917 = vmul.f32 %v1394, %v1394
          %v1918 = vmul.f32 %v1395, %v1395
          %v1919 = vmul.f32 %v1396, %v1396
          %v1920 = vmul.f32 %v1397, %v1397
          %v1921 = vmul.f32 %v1398, %v1398
          %v1922 = vmul.f32 %v1399, %v1399
          %v1923 = vmul.f32 %v1400, %v1400
          %v1924 = vmul.f32 %v1401, %v1401
          %v1925 = vmul.f32 %v1402, %v1402
          %v1926 = vmul.f32 %v1403, %v1403
          %v1927 = vmul.f32 %v1404, %v1404
          %v1928 = vmul.f32 %v1405, %v1405
          %v1929 = vmul.f32 %v1406, %v1406
          %v1930 = vmul.f32 %v1407, %v1407
          %v1931 = vmul.f32 %v1408, %v1408
          %v1932 = vmul.f32 %v1409, %v1409
          %v1933 = vmul.f32 %v1410, %v1410
          %v1934 = vmul.f32 %v1411, %v1411
          %v1935 = vmul.f32 %v1412, %v1412
          %v1936 = vmul.f32 %v1413, %v1413
          %v1937 = vmul.f32 %v1414, %v1414
          %v1938 = vmul.f32 %v1415, %v1415
          %v1939 = vmul.f32 %v1416, %v1416
          %v1940 = vmul.f32 %v1417, %v1417
          %v1941 = vmul.f32 %v1418, %v1418
          %v1942 = vmul.f32 %v1419, %v1419
          %v1943 = vmul.f32 %v1420, %v1420
          %v1944 = vmul.f32 %v1421, %v1421
          %v1945 = vmul.f32 %v1422, %v1422
          %v1946 = vmul.f32 %v1423, %v1423
          %v1947 = vmul.f32 %v1424, %v1424
          %v1948 = vmul.f32 %v1425, %v1425
          %v1949 = vmul.f32 %v1426, %v1426
          %v1950 = vmul.f32 %v1427, %v1427
          %v1951 = vmul.f32 %v1428, %v1428
          %v1952 = vmul.f32 %v1429, %v1429
          %v1953 = vmul.f32 %v1430, %v1430
          %v1954 = vmul.f32 %v1431, %v1431
          %v1955 = vmul.f32 %v1432, %v1432
          %v1956 = vmul.f32 %v1433, %v1433
          %v1957 = vmul.f32 %v1434, %v1434
          %v1958 = vmul.f32 %v1435, %v1435
          %v1959 = vmul.f32 %v1436, %v1436
          %v1960 = vmul.f32 %v1437, %v1437
          %v1961 = vmul.f32 %v1438, %v1438
          %v1962 = vmul.f32 %v1439, %v1439
          %v1963 = vmul.f32 %v1440, %v1440
          %v1964 = vmul.f32 %v1441, %v1441
          %v1965 = vmul.f32 %v1442, %v1442
          %v1966 = vmul.f32 %v1443, %v1443
          %v1967 = vmul.f32 %v1444, %v1444
          %v1968 = vmul.f32 %v1445, %v1445
          %v1969 = vsel %vm1306, %v1905, 0.0
          %v1970 = vsel %vm1306, %v1906, 0.0
          %v1971 = vadd.f32 %v1969, %v1970
          %v1972 = vsel %vm1306, %v1907, 0.0
          %v1973 = vadd.f32 %v1971, %v1972
          %v1974 = vsel %vm1306, %v1908, 0.0
          %v1975 = vadd.f32 %v1973, %v1974
          %v1976 = vsel %vm1306, %v1909, 0.0
          %v1977 = vadd.f32 %v1975, %v1976
          %v1978 = vsel %vm1306, %v1910, 0.0
          %v1979 = vadd.f32 %v1977, %v1978
          %v1980 = vsel %vm1306, %v1911, 0.0
          %v1981 = vadd.f32 %v1979, %v1980
          %v1982 = vsel %vm1306, %v1912, 0.0
          %v1983 = vadd.f32 %v1981, %v1982
          %v1984 = vsel %vm1306, %v1913, 0.0
          %v1985 = vadd.f32 %v1983, %v1984
          %v1986 = vsel %vm1306, %v1914, 0.0
          %v1987 = vadd.f32 %v1985, %v1986
          %v1988 = vsel %vm1306, %v1915, 0.0
          %v1989 = vadd.f32 %v1987, %v1988
          %v1990 = vsel %vm1306, %v1916, 0.0
          %v1991 = vadd.f32 %v1989, %v1990
          %v1992 = vsel %vm1306, %v1917, 0.0
          %v1993 = vadd.f32 %v1991, %v1992
          %v1994 = vsel %vm1306, %v1918, 0.0
          %v1995 = vadd.f32 %v1993, %v1994
          %v1996 = vsel %vm1306, %v1919, 0.0
          %v1997 = vadd.f32 %v1995, %v1996
          %v1998 = vsel %vm1306, %v1920, 0.0
          %v1999 = vadd.f32 %v1997, %v1998
          %v2000 = vsel %vm1306, %v1921, 0.0
          %v2001 = vadd.f32 %v1999, %v2000
          %v2002 = vsel %vm1306, %v1922, 0.0
          %v2003 = vadd.f32 %v2001, %v2002
          %v2004 = vsel %vm1306, %v1923, 0.0
          %v2005 = vadd.f32 %v2003, %v2004
          %v2006 = vsel %vm1306, %v1924, 0.0
          %v2007 = vadd.f32 %v2005, %v2006
          %v2008 = vsel %vm1306, %v1925, 0.0
          %v2009 = vadd.f32 %v2007, %v2008
          %v2010 = vsel %vm1306, %v1926, 0.0
          %v2011 = vadd.f32 %v2009, %v2010
          %v2012 = vsel %vm1306, %v1927, 0.0
          %v2013 = vadd.f32 %v2011, %v2012
          %v2014 = vsel %vm1306, %v1928, 0.0
          %v2015 = vadd.f32 %v2013, %v2014
          %v2016 = vsel %vm1306, %v1929, 0.0
          %v2017 = vadd.f32 %v2015, %v2016
          %v2018 = vsel %vm1306, %v1930, 0.0
          %v2019 = vadd.f32 %v2017, %v2018
          %v2020 = vsel %vm1306, %v1931, 0.0
          %v2021 = vadd.f32 %v2019, %v2020
          %v2022 = vsel %vm1306, %v1932, 0.0
          %v2023 = vadd.f32 %v2021, %v2022
          %v2024 = vsel %vm1306, %v1933, 0.0
          %v2025 = vadd.f32 %v2023, %v2024
          %v2026 = vsel %vm1306, %v1934, 0.0
          %v2027 = vadd.f32 %v2025, %v2026
          %v2028 = vsel %vm1306, %v1935, 0.0
          %v2029 = vadd.f32 %v2027, %v2028
          %v2030 = vsel %vm1306, %v1936, 0.0
          %v2031 = vadd.f32 %v2029, %v2030
          %v2032 = vsel %vm1306, %v1937, 0.0
          %v2033 = vadd.f32 %v2031, %v2032
          %v2034 = vsel %vm1306, %v1938, 0.0
          %v2035 = vadd.f32 %v2033, %v2034
          %v2036 = vsel %vm1306, %v1939, 0.0
          %v2037 = vadd.f32 %v2035, %v2036
          %v2038 = vsel %vm1306, %v1940, 0.0
          %v2039 = vadd.f32 %v2037, %v2038
          %v2040 = vsel %vm1306, %v1941, 0.0
          %v2041 = vadd.f32 %v2039, %v2040
          %v2042 = vsel %vm1306, %v1942, 0.0
          %v2043 = vadd.f32 %v2041, %v2042
          %v2044 = vsel %vm1306, %v1943, 0.0
          %v2045 = vadd.f32 %v2043, %v2044
          %v2046 = vsel %vm1306, %v1944, 0.0
          %v2047 = vadd.f32 %v2045, %v2046
          %v2048 = vsel %vm1306, %v1945, 0.0
          %v2049 = vadd.f32 %v2047, %v2048
          %v2050 = vsel %vm1306, %v1946, 0.0
          %v2051 = vadd.f32 %v2049, %v2050
          %v2052 = vsel %vm1306, %v1947, 0.0
          %v2053 = vadd.f32 %v2051, %v2052
          %v2054 = vsel %vm1306, %v1948, 0.0
          %v2055 = vadd.f32 %v2053, %v2054
          %v2056 = vsel %vm1306, %v1949, 0.0
          %v2057 = vadd.f32 %v2055, %v2056
          %v2058 = vsel %vm1306, %v1950, 0.0
          %v2059 = vadd.f32 %v2057, %v2058
          %v2060 = vsel %vm1306, %v1951, 0.0
          %v2061 = vadd.f32 %v2059, %v2060
          %v2062 = vsel %vm1306, %v1952, 0.0
          %v2063 = vadd.f32 %v2061, %v2062
          %v2064 = vsel %vm1306, %v1953, 0.0
          %v2065 = vadd.f32 %v2063, %v2064
          %v2066 = vsel %vm1306, %v1954, 0.0
          %v2067 = vadd.f32 %v2065, %v2066
          %v2068 = vsel %vm1306, %v1955, 0.0
          %v2069 = vadd.f32 %v2067, %v2068
          %v2070 = vsel %vm1306, %v1956, 0.0
          %v2071 = vadd.f32 %v2069, %v2070
          %v2072 = vsel %vm1306, %v1957, 0.0
          %v2073 = vadd.f32 %v2071, %v2072
          %v2074 = vsel %vm1306, %v1958, 0.0
          %v2075 = vadd.f32 %v2073, %v2074
          %v2076 = vsel %vm1306, %v1959, 0.0
          %v2077 = vadd.f32 %v2075, %v2076
          %v2078 = vsel %vm1306, %v1960, 0.0
          %v2079 = vadd.f32 %v2077, %v2078
          %v2080 = vsel %vm1306, %v1961, 0.0
          %v2081 = vadd.f32 %v2079, %v2080
          %v2082 = vsel %vm1306, %v1962, 0.0
          %v2083 = vadd.f32 %v2081, %v2082
          %v2084 = vsel %vm1306, %v1963, 0.0
          %v2085 = vadd.f32 %v2083, %v2084
          %v2086 = vsel %vm1306, %v1964, 0.0
          %v2087 = vadd.f32 %v2085, %v2086
          %v2088 = vsel %vm1306, %v1965, 0.0
          %v2089 = vadd.f32 %v2087, %v2088
          %v2090 = vsel %vm1306, %v1966, 0.0
          %v2091 = vadd.f32 %v2089, %v2090
          %v2092 = vsel %vm1306, %v1967, 0.0
          %v2093 = vadd.f32 %v2091, %v2092
          %v2094 = vsel %vm1306, %v1968, 0.0
          %v2095 = vadd.f32 %v2093, %v2094
          %v2096 = vrot.slane %v2095, 4
          %v2097 = vadd.f32 %v2095, %v2096
          %v2098 = vrot.slane %v2097, 2
          %v2099 = vadd.f32 %v2097, %v2098
          %v2100 = vrot.slane %v2099, 1
          %v2101 = vadd.f32 %v2099, %v2100
          %v2102 = vadd.f32 %v1904, %v2101
          %2103 = vst.msk [vmem:[#allocation5] sm:$0x1] %vm1902, %v2102
        $region40: #{tpu_custom_call.1} parent=27 // pred_fallthru
          _
        %s2104 = smul.u32 64, %s24
        %p2105 = scmp.lt.s32.totalorder %s2104, 255
        %s2106 = scalar_select %p2105, %s2104, 255
        %p2107 = scmp.lt.s32.totalorder %s23, 0
        %s2108 = scalar_select %p2107, %s23, 0
        %s2109 = sadd.s32 %s2108, %s2106
        %s2110 = smul.addr %s2109, 4
        %s2111 = scalar_lea.vmem %s2, %s2110
        // Predicated region
        $region41: #{tpu_custom_call.1} parent=27 // pred_check
          %p2112 = pneg %p113
        $region42: #{tpu_custom_call.1} parent=27 // pred_check_branch
          %2114 = sbr.rel (%p2112) target = $region44
        $region43: #{tpu_custom_call.1} parent=27 // pred_region
          %s2115 = smul.u32 64, %s24
        $region44: #{tpu_custom_call.1} parent=27 // pred_fallthru
          _
        // Predicated region
        $region45: #{tpu_custom_call.1} parent=27 // pred_check
          %p2116 = pneg %p139
        $region46: #{tpu_custom_call.1} parent=27 // pred_check_branch
          %2118 = sbr.rel (%p2116) target = $region48
        $region47: #{tpu_custom_call.1} parent=27 // pred_region
          %s2120 = ssub.s32 16, 16
          %2121 = vsyncadd [#allocation4], %s2120
          %s2122 = smul.addr %s23, 16
          %s2123 = scalar_lea.hbm %s3, %s2122
          %s2125 = sshll.u32 [#allocation3], 4
          %s2126 = int_to_ptr.vmem [resolvable:$true] %s2125
          %2128 = dma.vmem_to_hbm [thread:$0]  %s2126, 16, %s2123, [#allocation4]
        $region48: #{tpu_custom_call.1} parent=27 // pred_fallthru
          _
        // Predicated region
        $region49: #{tpu_custom_call.1} parent=27 // pred_check
          %p2129 = pneg %p165
        $region50: #{tpu_custom_call.1} parent=27 // pred_check_branch
          %2131 = sbr.rel (%p2129) target = $region52
        $region51: #{tpu_custom_call.1} parent=27 // pred_region
          %s2133 = ssub.s32 16, 16
          %2134 = vsyncadd [#allocation6], %s2133
          %s2135 = smul.addr %s23, 16
          %s2136 = scalar_lea.hbm %s4, %s2135
          %s2138 = sshll.u32 [#allocation5], 4
          %s2139 = int_to_ptr.vmem [resolvable:$true] %s2138
          %2141 = dma.vmem_to_hbm [thread:$0]  %s2139, 16, %s2136, [#allocation6]
        $region52: #{tpu_custom_call.1} parent=27 // pred_fallthru
          _
        // Predicated region
        $region53: #{tpu_custom_call.1} parent=27 // pred_check
          %p2142 = pneg %p139
        $region54: #{tpu_custom_call.1} parent=27 // pred_check_branch
          %2144 = sbr.rel (%p2142) target = $region56
        $region55: #{tpu_custom_call.1} parent=27 // pred_region
          %2145 = dma.done [#allocation4], 16
        $region56: #{tpu_custom_call.1} parent=27 // pred_fallthru
          _
        // Predicated region
        $region57: #{tpu_custom_call.1} parent=27 // pred_check
          %p2146 = pneg %p165
        $region58: #{tpu_custom_call.1} parent=27 // pred_check_branch
          %2148 = sbr.rel (%p2146) target = $region60
        $region59: #{tpu_custom_call.1} parent=27 // pred_region
          %2149 = dma.done [#allocation6], 16
        $region60: #{tpu_custom_call.1} parent=27 // pred_fallthru
          _
      $region28: #{tpu_custom_call.1} parent=5 // pred_fallthru
        _
      %p2150 = scmp.le.s32.totalorder 2, %s13
      // Predicated region
      $region61: #{tpu_custom_call.1} parent=5 // pred_check
        %p2151 = pneg %p2150
      $region62: #{tpu_custom_call.1} parent=5 // pred_check_branch
        %2153 = sbr.rel (%p2151) target = $region64
      $region63: #{tpu_custom_call.1} parent=5 // pred_region
        %s2154 = ssub.s32 %s13, 2
        // Predicated region
        $region65: #{tpu_custom_call.1} parent=63 // pred_check
          %p2155 = pneg %p119
        $region66: #{tpu_custom_call.1} parent=63 // pred_check_branch
          %2157 = sbr.rel (%p2155) target = $region68
        $region67: #{tpu_custom_call.1} parent=63 // pred_region
          %s2158 = smul.u32 64, %s27
          %p2159 = scmp.lt.s32.totalorder %s2158, 255
          %s2160 = scalar_select %p2159, %s2158, 255
          %p2161 = scmp.lt.s32.totalorder %s26, 0
          %s2162 = scalar_select %p2161, %s26, 0
          %s2163 = sadd.s32 %s2162, %s2160
          %s2164 = smul.addr %s2163, 4
          %s2165 = scalar_lea.vmem %s2, %s2164
        $region68: #{tpu_custom_call.1} parent=63 // pred_fallthru
          _
      $region64: #{tpu_custom_call.1} parent=5 // pred_fallthru
        _
    $region6: #{tpu_custom_call.1} parent=1 // loop_footer
      %s17 = sadd.s32 1, %s13
    $region7: #{tpu_custom_call.1} parent=1 // loop_footer_branch
      %12 = sbr.rel target = $region3
    $region8: #{tpu_custom_call.1} parent=1 // loop_exit
      _
    %2166 = vsyncpa [#allocation4], 1
    %s2167 = scalar_lea.sflag [#allocation4], 1
    %2168 = vsyncpa %s2167, 1
    %2169 = vsyncpa [#allocation6], 1

</llo_original>
